<compile_context>
chip_gen: v6e
topology: v6e:2x2x1
jax: 0.10.0
libtpu: 0.0.40
codegen_flags: <defaults>
</compile_context>

<pallas_src>
import functools
import math

import jax
import jax.numpy as jnp
from jax.experimental import pallas as pl
from jax.experimental.pallas import tpu as pltpu


# ----------------------------- Pallas kernel --------------------------------
def _make_s3im_kernel(valid_p, tile_p, mask_last_tile):
    """SSIM map + mean over lane tiles of the [K, P] patch matrices."""
    c1 = 0.01 ** 2
    c2 = 0.03 ** 2
    inv_p = 1.0 / float(valid_p)

    def kernel(w_ref, p1_ref, p2_ref, o_ref):
        step = pl.program_id(0)

        @pl.when(step == 0)
        def _init():
            o_ref[...] = jnp.zeros_like(o_ref)

        # Whole-block, vreg-dense math on [K, tile_p]; the Gaussian window is a
        # hoisted [K, 1] input block broadcast over the lane axis.
        x = p1_ref[...]
        y = p2_ref[...]
        w = w_ref[...]                       # [K, 1]
        wx = x * w
        wy = y * w
        mu1 = jnp.sum(wx, axis=0, keepdims=True)         # [1, tile_p]
        mu2 = jnp.sum(wy, axis=0, keepdims=True)
        e11 = jnp.sum(wx * x, axis=0, keepdims=True)
        e22 = jnp.sum(wy * y, axis=0, keepdims=True)
        e12 = jnp.sum(wx * y, axis=0, keepdims=True)

        mu1_sq = mu1 * mu1
        mu2_sq = mu2 * mu2
        mu1_mu2 = mu1 * mu2
        sigma1_sq = e11 - mu1_sq
        sigma2_sq = e22 - mu2_sq
        sigma12 = e12 - mu1_mu2

        numer = (2.0 * mu1_mu2 + c1) * (2.0 * sigma12 + c2)
        denom = (mu1_sq + mu2_sq + c1) * (sigma1_sq + sigma2_sq + c2)
        # Exact reciprocal so the end-to-end 1e-5 validation tolerance holds.
        ssim = numer * pl.reciprocal(denom, approx=False)

        if mask_last_tile:
            col = jax.lax.broadcasted_iota(jnp.int32, ssim.shape, 1) + step * tile_p
            ssim = jnp.where(col < valid_p, ssim, 0.0)

        o_ref[...] += jnp.sum(ssim, axis=1, keepdims=True)

        @pl.when(step == pl.num_programs(0) - 1)
        def _finalize():
            o_ref[...] = 1.0 - o_ref[...] * inv_p

    return kernel


# ------------------------------- JAX glue ------------------------------------
def _gaussian_window_col(kernel_size, sigma=1.5):
    ks = int(kernel_size)
    g = [math.exp(-float((x - ks // 2) ** 2) / (2.0 * sigma * sigma)) for x in range(ks)]
    s = sum(g)
    g = [v / s for v in g]
    w_flat = [g[kh] * g[kw] for kh in range(ks) for kw in range(ks)]   # row-major (kh, kw)
    return jnp.asarray(w_flat, dtype=jnp.float32).reshape(ks * ks, 1)


def _choose_lane_tile(p, max_tile=512):
    """Lane tile (multiple of 128, preferring an exact divisor of P)."""
    for t in (512, 384, 256, 128):
        if t <= max_tile and p % t == 0:
            return t, p
    t = max_tile if p > max_tile else (-(-p // 128)) * 128
    return t, (-(-p // t)) * t


def _make_res_index(key, n, repeat_time):
    # torch.randperm -> jax.random.permutation: first block identity, remaining
    # repeat_time-1 blocks are independent shuffles.
    idx_list = [jnp.arange(n)]
    for _ in range(1, repeat_time):
        key, sub = jax.random.split(key)
        idx_list.append(jax.random.permutation(sub, n))
    return jnp.concatenate(idx_list)            # [n * repeat_time]


def s3im_loss(src_vec, tar_vec, *, kernel_size=4, stride=4, repeat_time=10,
              patch_height=32, patch_width=32, key=None):
    """JAX/Pallas equivalent of S3IM.forward (src_vec, tar_vec: [1, N, 3] or [N, 3])."""
    if key is None:
        key = jax.random.PRNGKey(0)

    src = jnp.squeeze(src_vec, axis=0) if src_vec.ndim == 3 else src_vec   # [N, C]
    tar = jnp.squeeze(tar_vec, axis=0) if tar_vec.ndim == 3 else tar_vec

    n = tar.shape[0]
    c = src.shape[1]
    res_index = _make_res_index(key, n, repeat_time)          # [N * repeat_time]

    # Single fused gather on the stacked [N, 2C] array (instead of two gathers).
    both = jnp.concatenate([src, tar], axis=1)                # [N, 2C]
    both_all = both[res_index]                                # [N*R, 2C]

    h = patch_height
    w = patch_width * repeat_time
    # permute(1,0).reshape(C,H,W*R) for src and tar in one reshape.
    imgs = both_all.T.reshape(2, c, h, w).astype(jnp.float32)  # [src; tar]

    ks = kernel_size
    pad = (ks - 1) // 2                                        # matches F.conv2d call
    imgp = jnp.pad(imgs, ((0, 0), (0, 0), (pad, pad), (pad, pad)))
    hp, wp = h + 2 * pad, w + 2 * pad
    hout = (hp - ks) // stride + 1
    wout = (wp - ks) // stride + 1
    K = ks * ks
    P = c * hout * wout

    if stride == ks:
        # Non-overlapping windows: single slice + reshape + transpose im2col.
        r = imgp[:, :, :hout * ks, :wout * ks].reshape(2, c, hout, ks, wout, ks)
        patches = r.transpose(0, 3, 5, 1, 2, 4).reshape(2, K, P)   # [2, K, P]
    else:
        # Fallback for overlapping windows: strided-slice im2col.
        taps = []
        for kh in range(ks):
            for kw in range(ks):
                sl = imgp[:, :, kh:kh + (hout - 1) * stride + 1:stride,
                               kw:kw + (wout - 1) * stride + 1:stride]
                taps.append(sl.reshape(2, 1, P))
        patches = jnp.concatenate(taps, axis=1)                    # [2, K, P]

    tile_p, p_pad = _choose_lane_tile(P)
    if p_pad != P:
        patches = jnp.pad(patches, ((0, 0), (0, 0), (0, p_pad - P)))
    p_src, p_tar = patches[0], patches[1]                          # [K, p_pad]
    w_col = _gaussian_window_col(ks)                               # [K, 1]

    n_steps = p_pad // tile_p
    out = pl.pallas_call(
        _make_s3im_kernel(P, tile_p, p_pad != P),
        out_shape=jax.ShapeDtypeStruct((1, 1), jnp.float32),
        grid=(n_steps,),
        in_specs=[
            pl.BlockSpec((K, 1), lambda i: (0, 0)),        # Gaussian window (constant block)
            pl.BlockSpec((K, tile_p), lambda i: (0, i)),   # src patches, lane tile i
            pl.BlockSpec((K, tile_p), lambda i: (0, i)),   # tar patches, lane tile i
        ],
        out_specs=pl.BlockSpec((1, 1), lambda i: (0, 0)),  # resident accumulator
        compiler_params=pltpu.CompilerParams(dimension_semantics=("arbitrary",)),
    )(w_col, p_src, p_tar)
    return out[0, 0]


# Pure-JAX reference mirroring the PyTorch module exactly (depthwise
# lax.conv_general_dilated == F.conv2d with groups=channel).
def _s3im_ref(src_img, tar_img, kernel_size, stride, sigma=1.5):
    C = src_img.shape[0]
    x = jnp.arange(kernel_size, dtype=jnp.float32)
    g = jnp.exp(-((x - kernel_size // 2) ** 2) / (2.0 * sigma ** 2))
    g = g / jnp.sum(g)
    w2d = jnp.outer(g, g)
    window = jnp.broadcast_to(w2d, (C, 1, kernel_size, kernel_size)).astype(jnp.float32)
    pad = (kernel_size - 1) // 2

    def conv(x4):
        return jax.lax.conv_general_dilated(
            x4, window, window_strides=(stride, stride),
            padding=[(pad, pad), (pad, pad)],
            dimension_numbers=("NCHW", "OIHW", "NCHW"),
            feature_group_count=C)

    i1 = src_img[None].astype(jnp.float32)
    i2 = tar_img[None].astype(jnp.float32)
    mu1, mu2 = conv(i1), conv(i2)
    mu1_sq, mu2_sq, mu1_mu2 = mu1 * mu1, mu2 * mu2, mu1 * mu2
    s1 = conv(i1 * i1) - mu1_sq
    s2 = conv(i2 * i2) - mu2_sq
    s12 = conv(i1 * i2) - mu1_mu2
    c1, c2 = 0.01 ** 2, 0.03 ** 2
    m = ((2 * mu1_mu2 + c1) * (2 * s12 + c2)) / ((mu1_sq + mu2_sq + c1) * (s1 + s2 + c2))
    return 1.0 - jnp.mean(m)


def _run_case(kernel_size, stride, repeat_time, patch_height, patch_width, seed=0):
    n_rays = patch_height * patch_width
    key = jax.random.PRNGKey(seed)
    k1, k2, k3 = jax.random.split(key, 3)
    src_vec = jax.random.uniform(k1, (1, n_rays, 3), dtype=jnp.float32)
    tar_vec = jax.random.uniform(k2, (1, n_rays, 3), dtype=jnp.float32)

    loss_fn = jax.jit(functools.partial(
        s3im_loss, kernel_size=kernel_size, stride=stride,
        repeat_time=repeat_time, patch_height=patch_height,
        patch_width=patch_width))
    loss = jax.block_until_ready(loss_fn(src_vec, tar_vec, key=k3))

    # Independent depthwise-conv reference on identically shuffled images.
    src = jnp.squeeze(src_vec, 0)
    tar = jnp.squeeze(tar_vec, 0)
    ridx = _make_res_index(k3, n_rays, repeat_time)
    tar_img = tar[ridx].T.reshape(3, patch_height, patch_width * repeat_time)
    src_img = src[ridx].T.reshape(3, patch_height, patch_width * repeat_time)
    ref = _s3im_ref(src_img, tar_img, kernel_size, stride)

    assert jnp.isfinite(loss), loss
    assert jnp.allclose(loss, ref, atol=2e-5), (float(loss), float(ref))
    return float(loss)


if __name__ == "__main__":
    # Module-default config: kernel 4, stride 4, repeat 10, 32x32 virtual patch
    # -> [K=16, P=1920] patch matrices, 5 grid steps of 384 lanes (no padding).
    _run_case(kernel_size=4, stride=4, repeat_time=10,
              patch_height=32, patch_width=32, seed=0)
    # Small config exercising the padded / masked last lane tile (P=192 -> 256).
    _run_case(kernel_size=4, stride=4, repeat_time=4,
              patch_height=16, patch_width=16, seed=0)
    # TODO(synk): the torch.randperm shuffle gather stays in the JAX wrapper;
    # a data-dependent gather of individual rays has no efficient in-kernel
    # TPU equivalent at this size.
    print("KERNEL_OK")
</pallas_src>

<mosaic_0001>
module attributes {stable_mosaic.version = 11 : i64} {
  func.func @kernel(%arg0: i32, %arg1: memref<16x1xf32, #tpu.memory_space<vmem>>, %arg2: memref<16x384xf32, #tpu.memory_space<vmem>>, %arg3: memref<16x384xf32, #tpu.memory_space<vmem>>, %arg4: memref<1x1xf32, #tpu.memory_space<vmem>>) attributes {dimension_semantics = [#tpu.dimension_semantics<arbitrary>], iteration_bounds = array<i64: 5>, scalar_prefetch = 0 : i64, scratch_operands = 0 : i64, tpu.core_type = #tpu.core_type<tc>, window_params = [{pipeline_mode = #tpu.pipeline_mode<synchronous>, transform_indices = @transform_0, window_bounds = array<i64: 16, 1>}, {transform_indices = @transform_1, window_bounds = array<i64: 16, 384>}, {transform_indices = @transform_2, window_bounds = array<i64: 16, 384>}, {pipeline_mode = #tpu.pipeline_mode<synchronous>, transform_indices = @transform_3, window_bounds = array<i64: 1, 1>}]} {
    %c0_i32 = arith.constant 0 : i32
    %0 = arith.cmpi eq, %arg0, %c0_i32 : i32
    %1 = arith.extui %0 : i1 to i32
    %c0_i32_0 = arith.constant 0 : i32
    %2 = arith.cmpi ne, %1, %c0_i32_0 : i32
    scf.if %2 {
      %cst_22 = arith.constant 0.000000e+00 : f32
      %55 = vector.broadcast %cst_22 : f32 to vector<1x1xf32>
      %c0_23 = arith.constant 0 : index
      %c0_24 = arith.constant 0 : index
      %56 = vector.load %arg4[%c0_23, %c0_24] : memref<1x1xf32, #tpu.memory_space<vmem>>, vector<1x1xf32>
      tpu.vector_store %arg4[%c0_23, %c0_24], %55 {strides = array<i32>} : memref<1x1xf32, #tpu.memory_space<vmem>>, vector<1x1xf32>,
    } else {
    }
    %c0 = arith.constant 0 : index
    %c0_1 = arith.constant 0 : index
    %3 = vector.load %arg2[%c0, %c0_1] : memref<16x384xf32, #tpu.memory_space<vmem>>, vector<16x384xf32>
    %c0_2 = arith.constant 0 : index
    %c0_3 = arith.constant 0 : index
    %4 = vector.load %arg3[%c0_2, %c0_3] : memref<16x384xf32, #tpu.memory_space<vmem>>, vector<16x384xf32>
    %c0_4 = arith.constant 0 : index
    %c0_5 = arith.constant 0 : index
    %5 = vector.load %arg1[%c0_4, %c0_5] : memref<16x1xf32, #tpu.memory_space<vmem>>, vector<16x1xf32>
    %6 = vector.broadcast %5 : vector<16x1xf32> to vector<16x384xf32>
    %7 = arith.mulf %3, %6 : vector<16x384xf32>
    %8 = vector.broadcast %5 : vector<16x1xf32> to vector<16x384xf32>
    %9 = arith.mulf %4, %8 : vector<16x384xf32>
    %cst = arith.constant dense<0.000000e+00> : vector<384xf32>
    %10 = vector.multi_reduction <add>, %7, %cst [0] : vector<16x384xf32> to vector<384xf32>
    %11 = vector.shape_cast %10 : vector<384xf32> to vector<1x384xf32>
    %cst_6 = arith.constant dense<0.000000e+00> : vector<384xf32>
    %12 = vector.multi_reduction <add>, %9, %cst_6 [0] : vector<16x384xf32> to vector<384xf32>
    %13 = vector.shape_cast %12 : vector<384xf32> to vector<1x384xf32>
    %14 = arith.mulf %7, %3 : vector<16x384xf32>
    %cst_7 = arith.constant dense<0.000000e+00> : vector<384xf32>
    %15 = vector.multi_reduction <add>, %14, %cst_7 [0] : vector<16x384xf32> to vector<384xf32>
    %16 = vector.shape_cast %15 : vector<384xf32> to vector<1x384xf32>
    %17 = arith.mulf %9, %4 : vector<16x384xf32>
    %cst_8 = arith.constant dense<0.000000e+00> : vector<384xf32>
    %18 = vector.multi_reduction <add>, %17, %cst_8 [0] : vector<16x384xf32> to vector<384xf32>
    %19 = vector.shape_cast %18 : vector<384xf32> to vector<1x384xf32>
    %20 = arith.mulf %7, %4 : vector<16x384xf32>
    %cst_9 = arith.constant dense<0.000000e+00> : vector<384xf32>
    %21 = vector.multi_reduction <add>, %20, %cst_9 [0] : vector<16x384xf32> to vector<384xf32>
    %22 = vector.shape_cast %21 : vector<384xf32> to vector<1x384xf32>
    %23 = arith.mulf %11, %11 : vector<1x384xf32>
    %24 = arith.mulf %13, %13 : vector<1x384xf32>
    %25 = arith.mulf %11, %13 : vector<1x384xf32>
    %26 = arith.subf %16, %23 : vector<1x384xf32>
    %27 = arith.subf %19, %24 : vector<1x384xf32>
    %28 = arith.subf %22, %25 : vector<1x384xf32>
    %cst_10 = arith.constant 2.000000e+00 : f32
    %29 = vector.broadcast %cst_10 : f32 to vector<1x384xf32>
    %30 = arith.mulf %29, %25 : vector<1x384xf32>
    %cst_11 = arith.constant 9.99999974E-5 : f32
    %31 = vector.broadcast %cst_11 : f32 to vector<1x384xf32>
    %32 = arith.addf %30, %31 : vector<1x384xf32>
    %cst_12 = arith.constant 2.000000e+00 : f32
    %33 = vector.broadcast %cst_12 : f32 to vector<1x384xf32>
    %34 = arith.mulf %33, %28 : vector<1x384xf32>
    %cst_13 = arith.constant 8.99999984E-4 : f32
    %35 = vector.broadcast %cst_13 : f32 to vector<1x384xf32>
    %36 = arith.addf %34, %35 : vector<1x384xf32>
    %37 = arith.mulf %32, %36 : vector<1x384xf32>
    %38 = arith.addf %23, %24 : vector<1x384xf32>
    %cst_14 = arith.constant 9.99999974E-5 : f32
    %39 = vector.broadcast %cst_14 : f32 to vector<1x384xf32>
    %40 = arith.addf %38, %39 : vector<1x384xf32>
    %41 = arith.addf %26, %27 : vector<1x384xf32>
    %cst_15 = arith.constant 8.99999984E-4 : f32
    %42 = vector.broadcast %cst_15 : f32 to vector<1x384xf32>
    %43 = arith.addf %41, %42 : vector<1x384xf32>
    %44 = arith.mulf %40, %43 : vector<1x384xf32>
    %45 = tpu.reciprocal %44 : vector<1x384xf32> -> vector<1x384xf32>
    %46 = arith.mulf %37, %45 : vector<1x384xf32>
    %c0_16 = arith.constant 0 : index
    %c0_17 = arith.constant 0 : index
    %47 = vector.load %arg4[%c0_16, %c0_17] : memref<1x1xf32, #tpu.memory_space<vmem>>, vector<1x1xf32>
    %cst_18 = arith.constant dense<0.000000e+00> : vector<1xf32>
    %48 = vector.multi_reduction <add>, %46, %cst_18 [1] : vector<1x384xf32> to vector<1xf32>
    %49 = vector.shape_cast %48 : vector<1xf32> to vector<1x1xf32>
    %50 = arith.addf %47, %49 : vector<1x1xf32>
    %c0_19 = arith.constant 0 : index
    %c0_20 = arith.constant 0 : index
    %51 = vector.load %arg4[%c0_19, %c0_20] : memref<1x1xf32, #tpu.memory_space<vmem>>, vector<1x1xf32>
    tpu.vector_store %arg4[%c0_19, %c0_20], %50 {strides = array<i32>} : memref<1x1xf32, #tpu.memory_space<vmem>>, vector<1x1xf32>,
    %c4_i32 = arith.constant 4 : i32
    %52 = arith.cmpi eq, %arg0, %c4_i32 : i32
    %53 = arith.extui %52 : i1 to i32
    %c0_i32_21 = arith.constant 0 : i32
    %54 = arith.cmpi ne, %53, %c0_i32_21 : i32
    scf.if %54 {
      %c0_22 = arith.constant 0 : index
      %c0_23 = arith.constant 0 : index
      %55 = vector.load %arg4[%c0_22, %c0_23] : memref<1x1xf32, #tpu.memory_space<vmem>>, vector<1x1xf32>
      %cst_24 = arith.constant 5.2083336E-4 : f32
      %56 = vector.broadcast %cst_24 : f32 to vector<1x1xf32>
      %57 = arith.mulf %55, %56 : vector<1x1xf32>
      %cst_25 = arith.constant 1.000000e+00 : f32
      %58 = vector.broadcast %cst_25 : f32 to vector<1x1xf32>
      %59 = arith.subf %58, %57 : vector<1x1xf32>
      %c0_26 = arith.constant 0 : index
      %c0_27 = arith.constant 0 : index
      %60 = vector.load %arg4[%c0_26, %c0_27] : memref<1x1xf32, #tpu.memory_space<vmem>>, vector<1x1xf32>
      tpu.vector_store %arg4[%c0_26, %c0_27], %59 {strides = array<i32>} : memref<1x1xf32, #tpu.memory_space<vmem>>, vector<1x1xf32>,
    } else {
    }
    return
  }
  func.func @transform_0(%arg0: i32) -> (i32, i32) {
    %c0_i32 = arith.constant 0 : i32
    %c0_i32_0 = arith.constant 0 : i32
    %c0_i32_1 = arith.constant 0 : i32
    return %c0_i32, %c0_i32_0 : i32, i32
  }
  func.func @transform_1(%arg0: i32) -> (i32, i32) {
    %c0_i32 = arith.constant 0 : i32
    %c0_i32_0 = arith.constant 0 : i32
    return %c0_i32, %arg0 : i32, i32
  }
  func.func @transform_2(%arg0: i32) -> (i32, i32) {
    %c0_i32 = arith.constant 0 : i32
    %c0_i32_0 = arith.constant 0 : i32
    return %c0_i32, %arg0 : i32, i32
  }
  func.func @transform_3(%arg0: i32) -> (i32, i32) {
    %c0_i32 = arith.constant 0 : i32
    %c0_i32_0 = arith.constant 0 : i32
    %c0_i32_1 = arith.constant 0 : i32
    return %c0_i32, %c0_i32_0 : i32, i32
  }
}

</mosaic_0001>

<llo_original>
// kernel: squeeze.51
$region0: #{squeeze.51}
  %s0 = inlined_call_operand.vmem [shape: f32[1,4,4,3,8,80], index: 0, kind: input, shape index: {}]
  %s1 = inlined_call_operand.vmem [shape: f32[16,1920], index: 1, kind: output, shape index: {}]
  %v2 = vld [vmem:[%s0] ss:$8 sm:$0xf]
  %v3 = vld [vmem:[%s0] ss:$8 sm:$0xf0]
  %vm4 = vcmask 1047556
  %v5 = vsel %vm4, %v3, %v2
  %vm6 = vcmask 654336
  %7 = vst.msk [vmem:[%s1] ss:$40 sm:$0x7] %vm6, %v5
  %s8 = scalar_lea.vmem %s1, 4294967177
  %9 = vst.msk [vmem:[%s8] ss:$40 sm:$0x38] %vm6, %v5
  %s10 = scalar_lea.vmem %s1, 4294967058
  %11 = vst.msk [vmem:[%s10] ss:$40 sm:$0xc0] %vm6, %v5
  %s12 = scalar_lea.vmem %s0, 64
  %v13 = vld [vmem:[%s12] ss:$8 sm:$0xf]
  %s14 = scalar_lea.vmem %s0, 64
  %v15 = vld [vmem:[%s14] ss:$8 sm:$0xf0]
  %vm16 = vcmask 1047556
  %v17 = vsel %vm16, %v15, %v13
  %vm18 = vcmask 654336
  %s19 = scalar_lea.vmem %s1, 82
  %20 = vst.msk [vmem:[%s19] ss:$-79 sm:$0x3] %vm18, %v17
  %s21 = scalar_lea.vmem %s1, 4294967259
  %22 = vst.msk [vmem:[%s21] ss:$40 sm:$0xc] %vm18, %v17
  %s23 = scalar_lea.vmem %s1, 4294967140
  %24 = vst.msk [vmem:[%s23] ss:$40 sm:$0x70] %vm18, %v17
  %s25 = scalar_lea.vmem %s1, 4294967294
  %26 = vst.msk [vmem:[%s25] sm:$0x80] %vm18, %v17
  %s27 = scalar_lea.vmem %s0, 128
  %v28 = vld [vmem:[%s27] ss:$8 sm:$0xf]
  %s29 = scalar_lea.vmem %s0, 128
  %v30 = vld [vmem:[%s29] ss:$8 sm:$0xf0]
  %vm31 = vcmask 1047556
  %v32 = vsel %vm31, %v30, %v28
  %vm33 = vcmask 654336
  %s34 = scalar_lea.vmem %s1, 45
  %35 = vst.msk [vmem:[%s34] ss:$40 sm:$0x3] %vm33, %v32
  %s36 = scalar_lea.vmem %s1, 4294967222
  %37 = vst.msk [vmem:[%s36] ss:$40 sm:$0x1c] %vm33, %v32
  %s38 = scalar_lea.vmem %s1, 4294967103
  %39 = vst.msk [vmem:[%s38] ss:$40 sm:$0xe0] %vm33, %v32
  %s40 = scalar_lea.vmem %s0, 192
  %v41 = vld [vmem:[%s40] ss:$8 sm:$0xf]
  %s42 = scalar_lea.vmem %s0, 192
  %v43 = vld [vmem:[%s42] ss:$8 sm:$0xf0]
  %vm44 = vcmask 1047556
  %v45 = vsel %vm44, %v43, %v41
  %vm46 = vcmask 654336
  %s47 = scalar_lea.vmem %s1, 120
  %48 = vst.msk [vmem:[%s47] ss:$40 sm:$0x7] %vm46, %v45
  %s49 = scalar_lea.vmem %s1, 1
  %50 = vst.msk [vmem:[%s49] ss:$40 sm:$0x38] %vm46, %v45
  %s51 = scalar_lea.vmem %s1, 4294967178
  %52 = vst.msk [vmem:[%s51] ss:$40 sm:$0xc0] %vm46, %v45
  %s53 = scalar_lea.vmem %s0, 256
  %v54 = vld [vmem:[%s53] ss:$8 sm:$0xf]
  %s55 = scalar_lea.vmem %s0, 256
  %v56 = vld [vmem:[%s55] ss:$8 sm:$0xf0]
  %vm57 = vcmask 1047556
  %v58 = vsel %vm57, %v56, %v54
  %vm59 = vcmask 654336
  %s60 = scalar_lea.vmem %s1, 202
  %61 = vst.msk [vmem:[%s60] ss:$-79 sm:$0x3] %vm59, %v58
  %s62 = scalar_lea.vmem %s1, 83
  %63 = vst.msk [vmem:[%s62] ss:$40 sm:$0xc] %vm59, %v58
  %s64 = scalar_lea.vmem %s1, 4294967260
  %65 = vst.msk [vmem:[%s64] ss:$40 sm:$0x70] %vm59, %v58
  %s66 = scalar_lea.vmem %s1, 118
  %67 = vst.msk [vmem:[%s66] sm:$0x80] %vm59, %v58
  %s68 = scalar_lea.vmem %s0, 320
  %v69 = vld [vmem:[%s68] ss:$8 sm:$0xf]
  %s70 = scalar_lea.vmem %s0, 320
  %v71 = vld [vmem:[%s70] ss:$8 sm:$0xf0]
  %vm72 = vcmask 1047556
  %v73 = vsel %vm72, %v71, %v69
  %vm74 = vcmask 654336
  %s75 = scalar_lea.vmem %s1, 165
  %76 = vst.msk [vmem:[%s75] ss:$40 sm:$0x3] %vm74, %v73
  %s77 = scalar_lea.vmem %s1, 46
  %78 = vst.msk [vmem:[%s77] ss:$40 sm:$0x1c] %vm74, %v73
  %s79 = scalar_lea.vmem %s1, 4294967223
  %80 = vst.msk [vmem:[%s79] ss:$40 sm:$0xe0] %vm74, %v73
  %s81 = scalar_lea.vmem %s0, 19
  %v82 = vld [vmem:[%s81] ss:$24 sm:$0xf]
  %s83 = scalar_lea.vmem %s0, 19
  %v84 = vld [vmem:[%s83] ss:$24 sm:$0xf0]
  %vm85 = vcmask 1047556
  %v86 = vsel %vm85, %v84, %v82
  %s87 = scalar_lea.vmem %s0, 195
  %v88 = vld [vmem:[%s87] ss:$24 sm:$0xf]
  %s89 = scalar_lea.vmem %s0, 195
  %v90 = vld [vmem:[%s89] ss:$24 sm:$0xf0]
  %vm91 = vcmask 1047556
  %v92 = vsel %vm91, %v90, %v88
  %vm93 = vcmask 130048
  %v94 = vsel %vm93, %v92, %v86
  %95 = vrot.lane.b32.xlu0 %v94, 112
  %v96 = vpop.permute.xlu0 %95
  %vm97 = vcmask 523264
  %s98 = scalar_lea.vmem %s1, 96
  %99 = vst.msk [vmem:[%s98] sm:$0xff] %vm97, %v96
  %vm100 = vcmask 1048448
  %s101 = scalar_lea.vmem %s1, 128
  %102 = vst.msk [vmem:[%s101] sm:$0xff] %vm100, %v96
  %s103 = scalar_lea.vmem %s0, 195
  %v104 = vld [vmem:[%s103] ss:$24 sm:$0xf]
  %s105 = scalar_lea.vmem %s0, 195
  %v106 = vld [vmem:[%s105] ss:$24 sm:$0xf0]
  %vm107 = vcmask 1047556
  %v108 = vsel %vm107, %v106, %v104
  %s109 = scalar_lea.vmem %s0, 3
  %v110 = vld [vmem:[%s109] ss:$24 sm:$0xf]
  %s111 = scalar_lea.vmem %s0, 3
  %v112 = vld [vmem:[%s111] ss:$24 sm:$0xf0]
  %vm113 = vcmask 1047556
  %v114 = vsel %vm113, %v112, %v110
  %vm115 = vcmask 130048
  %v116 = vsel %vm115, %v114, %v108
  %117 = vrot.lane.b32.xlu0 %v116, 112
  %v118 = vpop.permute.xlu0 %117
  %vm119 = vcmask 523264
  %s120 = scalar_lea.vmem %s1, 136
  %121 = vst.msk [vmem:[%s120] sm:$0xff] %vm119, %v118
  %vm122 = vcmask 1048448
  %s123 = scalar_lea.vmem %s1, 8
  %124 = vst.msk [vmem:[%s123] sm:$0xff] %vm122, %v118
  %s125 = scalar_lea.vmem %s0, 3
  %v126 = vld [vmem:[%s125] ss:$24 sm:$0xf]
  %s127 = scalar_lea.vmem %s0, 3
  %v128 = vld [vmem:[%s127] ss:$24 sm:$0xf0]
  %vm129 = vcmask 1047556
  %v130 = vsel %vm129, %v128, %v126
  %s131 = scalar_lea.vmem %s0, 203
  %v132 = vld [vmem:[%s131] ss:$24 sm:$0xf]
  %s133 = scalar_lea.vmem %s0, 203
  %v134 = vld [vmem:[%s133] ss:$24 sm:$0xf0]
  %vm135 = vcmask 1047556
  %v136 = vsel %vm135, %v134, %v132
  %vm137 = vcmask 130048
  %v138 = vsel %vm137, %v136, %v130
  %139 = vrot.lane.b32.xlu0 %v138, 112
  %v140 = vpop.permute.xlu0 %139
  %vm141 = vcmask 523264
  %s142 = scalar_lea.vmem %s1, 16
  %143 = vst.msk [vmem:[%s142] sm:$0xff] %vm141, %v140
  %vm144 = vcmask 1048448
  %s145 = scalar_lea.vmem %s1, 168
  %146 = vst.msk [vmem:[%s145] sm:$0xff] %vm144, %v140
  %s147 = scalar_lea.vmem %s0, 203
  %v148 = vld [vmem:[%s147] ss:$24 sm:$0xf]
  %s149 = scalar_lea.vmem %s0, 203
  %v150 = vld [vmem:[%s149] ss:$24 sm:$0xf0]
  %vm151 = vcmask 1047556
  %v152 = vsel %vm151, %v150, %v148
  %s153 = scalar_lea.vmem %s0, 11
  %v154 = vld [vmem:[%s153] ss:$24 sm:$0xf]
  %s155 = scalar_lea.vmem %s0, 11
  %v156 = vld [vmem:[%s155] ss:$24 sm:$0xf0]
  %vm157 = vcmask 1047556
  %v158 = vsel %vm157, %v156, %v154
  %vm159 = vcmask 130048
  %v160 = vsel %vm159, %v158, %v152
  %161 = vrot.lane.b32.xlu0 %v160, 112
  %v162 = vpop.permute.xlu0 %161
  %vm163 = vcmask 523264
  %s164 = scalar_lea.vmem %s1, 176
  %165 = vst.msk [vmem:[%s164] sm:$0xff] %vm163, %v162
  %vm166 = vcmask 1048448
  %s167 = scalar_lea.vmem %s1, 48
  %168 = vst.msk [vmem:[%s167] sm:$0xff] %vm166, %v162
  %s169 = scalar_lea.vmem %s0, 11
  %v170 = vld [vmem:[%s169] ss:$24 sm:$0xf]
  %s171 = scalar_lea.vmem %s0, 11
  %v172 = vld [vmem:[%s171] ss:$24 sm:$0xf0]
  %vm173 = vcmask 1047556
  %v174 = vsel %vm173, %v172, %v170
  %s175 = scalar_lea.vmem %s0, 211
  %v176 = vld [vmem:[%s175] ss:$24 sm:$0xf]
  %s177 = scalar_lea.vmem %s0, 211
  %v178 = vld [vmem:[%s177] ss:$24 sm:$0xf0]
  %vm179 = vcmask 1047556
  %v180 = vsel %vm179, %v178, %v176
  %vm181 = vcmask 130048
  %v182 = vsel %vm181, %v180, %v174
  %183 = vrot.lane.b32.xlu0 %v182, 112
  %v184 = vpop.permute.xlu0 %183
  %vm185 = vcmask 523264
  %s186 = scalar_lea.vmem %s1, 56
  %187 = vst.msk [vmem:[%s186] sm:$0xff] %vm185, %v184
  %vm188 = vcmask 1048448
  %s189 = scalar_lea.vmem %s1, 208
  %190 = vst.msk [vmem:[%s189] sm:$0xff] %vm188, %v184
  %s191 = scalar_lea.vmem %s0, 211
  %v192 = vld [vmem:[%s191] ss:$24 sm:$0xf]
  %s193 = scalar_lea.vmem %s0, 211
  %v194 = vld [vmem:[%s193] ss:$24 sm:$0xf0]
  %vm195 = vcmask 1047556
  %v196 = vsel %vm195, %v194, %v192
  %s197 = scalar_lea.vmem %s0, 19
  %v198 = vld [vmem:[%s197] ss:$24 sm:$0xf]
  %s199 = scalar_lea.vmem %s0, 19
  %v200 = vld [vmem:[%s199] ss:$24 sm:$0xf0]
  %vm201 = vcmask 1047556
  %v202 = vsel %vm201, %v200, %v198
  %vm203 = vcmask 130048
  %v204 = vsel %vm203, %v202, %v196
  %205 = vrot.lane.b32.xlu0 %v204, 112
  %v206 = vpop.permute.xlu0 %205
  %vm207 = vcmask 523264
  %s208 = scalar_lea.vmem %s1, 216
  %209 = vst.msk [vmem:[%s208] sm:$0xff] %vm207, %v206
  %vm210 = vcmask 1048448
  %s211 = scalar_lea.vmem %s1, 88
  %212 = vst.msk [vmem:[%s211] sm:$0xff] %vm210, %v206
  %s213 = scalar_lea.vmem %s0, 6
  %v214 = vld [vmem:[%s213] ss:$24 sm:$0xf]
  %s215 = scalar_lea.vmem %s0, 6
  %v216 = vld [vmem:[%s215] ss:$24 sm:$0xf0]
  %vm217 = vcmask 1047556
  %v218 = vsel %vm217, %v216, %v214
  %s219 = scalar_lea.vmem %s0, 14
  %v220 = vld [vmem:[%s219] ss:$24 sm:$0xf]
  %s221 = scalar_lea.vmem %s0, 14
  %v222 = vld [vmem:[%s221] ss:$24 sm:$0xf0]
  %vm223 = vcmask 1047556
  %v224 = vsel %vm223, %v222, %v220
  %vm225 = vcmask 261120
  %v226 = vsel %vm225, %v224, %v218
  %227 = vrot.lane.b32.xlu0 %v226, 96
  %v228 = vpop.permute.xlu0 %227
  %vm229 = vcmask 392192
  %s230 = scalar_lea.vmem %s1, 32
  %231 = vst.msk [vmem:[%s230] sm:$0xff] %vm229, %v228
  %vm232 = vcmask 1048320
  %s233 = scalar_lea.vmem %s1, 64
  %234 = vst.msk [vmem:[%s233] sm:$0xff] %vm232, %v228
  %s235 = scalar_lea.vmem %s0, 206
  %v236 = vld [vmem:[%s235] ss:$24 sm:$0xf]
  %s237 = scalar_lea.vmem %s0, 206
  %v238 = vld [vmem:[%s237] ss:$24 sm:$0xf0]
  %vm239 = vcmask 1047556
  %v240 = vsel %vm239, %v238, %v236
  %s241 = scalar_lea.vmem %s0, 214
  %v242 = vld [vmem:[%s241] ss:$24 sm:$0xf]
  %s243 = scalar_lea.vmem %s0, 214
  %v244 = vld [vmem:[%s243] ss:$24 sm:$0xf0]
  %vm245 = vcmask 1047556
  %v246 = vsel %vm245, %v244, %v242
  %vm247 = vcmask 261120
  %v248 = vsel %vm247, %v246, %v240
  %249 = vrot.lane.b32.xlu0 %v248, 96
  %v250 = vpop.permute.xlu0 %249
  %vm251 = vcmask 392192
  %s252 = scalar_lea.vmem %s1, 192
  %253 = vst.msk [vmem:[%s252] sm:$0xff] %vm251, %v250
  %vm254 = vcmask 1048320
  %s255 = scalar_lea.vmem %s1, 224
  %256 = vst.msk [vmem:[%s255] sm:$0xff] %vm254, %v250
  %s257 = scalar_lea.vmem %s0, 14
  %v258 = vld [vmem:[%s257] ss:$24 sm:$0xf]
  %s259 = scalar_lea.vmem %s0, 14
  %v260 = vld [vmem:[%s259] ss:$24 sm:$0xf0]
  %vm261 = vcmask 1047556
  %v262 = vsel %vm261, %v260, %v258
  %s263 = scalar_lea.vmem %s0, 22
  %v264 = vld [vmem:[%s263] ss:$24 sm:$0xf]
  %s265 = scalar_lea.vmem %s0, 22
  %v266 = vld [vmem:[%s265] ss:$24 sm:$0xf0]
  %vm267 = vcmask 1047556
  %v268 = vsel %vm267, %v266, %v264
  %vm269 = vcmask 261120
  %v270 = vsel %vm269, %v268, %v262
  %271 = vrot.lane.b32.xlu0 %v270, 96
  %v272 = vpop.permute.xlu0 %271
  %vm273 = vcmask 392192
  %s274 = scalar_lea.vmem %s1, 72
  %275 = vst.msk [vmem:[%s274] sm:$0xff] %vm273, %v272
  %vm276 = vcmask 1048320
  %s277 = scalar_lea.vmem %s1, 104
  %278 = vst.msk [vmem:[%s277] sm:$0xff] %vm276, %v272
  %s279 = scalar_lea.vmem %s0, 214
  %v280 = vld [vmem:[%s279] ss:$24 sm:$0xf]
  %s281 = scalar_lea.vmem %s0, 214
  %v282 = vld [vmem:[%s281] ss:$24 sm:$0xf0]
  %vm283 = vcmask 1047556
  %v284 = vsel %vm283, %v282, %v280
  %s285 = scalar_lea.vmem %s0, 198
  %v286 = vld [vmem:[%s285] ss:$24 sm:$0xf]
  %s287 = scalar_lea.vmem %s0, 198
  %v288 = vld [vmem:[%s287] ss:$24 sm:$0xf0]
  %vm289 = vcmask 1047556
  %v290 = vsel %vm289, %v288, %v286
  %vm291 = vcmask 261120
  %v292 = vsel %vm291, %v290, %v284
  %293 = vrot.lane.b32.xlu0 %v292, 96
  %v294 = vpop.permute.xlu0 %293
  %vm295 = vcmask 392192
  %s296 = scalar_lea.vmem %s1, 232
  %297 = vst.msk [vmem:[%s296] sm:$0xff] %vm295, %v294
  %vm298 = vcmask 1048320
  %s299 = scalar_lea.vmem %s1, 144
  %300 = vst.msk [vmem:[%s299] sm:$0xff] %vm298, %v294
  %s301 = scalar_lea.vmem %s0, 22
  %v302 = vld [vmem:[%s301] ss:$24 sm:$0xf]
  %s303 = scalar_lea.vmem %s0, 22
  %v304 = vld [vmem:[%s303] ss:$24 sm:$0xf0]
  %vm305 = vcmask 1047556
  %v306 = vsel %vm305, %v304, %v302
  %s307 = scalar_lea.vmem %s0, 6
  %v308 = vld [vmem:[%s307] ss:$24 sm:$0xf]
  %s309 = scalar_lea.vmem %s0, 6
  %v310 = vld [vmem:[%s309] ss:$24 sm:$0xf0]
  %vm311 = vcmask 1047556
  %v312 = vsel %vm311, %v310, %v308
  %vm313 = vcmask 261120
  %v314 = vsel %vm313, %v312, %v306
  %315 = vrot.lane.b32.xlu0 %v314, 96
  %v316 = vpop.permute.xlu0 %315
  %vm317 = vcmask 392192
  %s318 = scalar_lea.vmem %s1, 112
  %319 = vst.msk [vmem:[%s318] sm:$0xff] %vm317, %v316
  %vm320 = vcmask 1048320
  %s321 = scalar_lea.vmem %s1, 24
  %322 = vst.msk [vmem:[%s321] sm:$0xff] %vm320, %v316
  %s323 = scalar_lea.vmem %s0, 198
  %v324 = vld [vmem:[%s323] ss:$24 sm:$0xf]
  %s325 = scalar_lea.vmem %s0, 198
  %v326 = vld [vmem:[%s325] ss:$24 sm:$0xf0]
  %vm327 = vcmask 1047556
  %v328 = vsel %vm327, %v326, %v324
  %s329 = scalar_lea.vmem %s0, 206
  %v330 = vld [vmem:[%s329] ss:$24 sm:$0xf]
  %s331 = scalar_lea.vmem %s0, 206
  %v332 = vld [vmem:[%s331] ss:$24 sm:$0xf0]
  %vm333 = vcmask 1047556
  %v334 = vsel %vm333, %v332, %v330
  %vm335 = vcmask 261120
  %v336 = vsel %vm335, %v334, %v328
  %337 = vrot.lane.b32.xlu0 %v336, 96
  %v338 = vpop.permute.xlu0 %337
  %vm339 = vcmask 392192
  %s340 = scalar_lea.vmem %s1, 152
  %341 = vst.msk [vmem:[%s340] sm:$0xff] %vm339, %v338
  %vm342 = vcmask 1048320
  %s343 = scalar_lea.vmem %s1, 184
  %344 = vst.msk [vmem:[%s343] sm:$0xff] %vm342, %v338
  %s345 = scalar_lea.vmem %s0, 193
  %v346 = vld [vmem:[%s345] ss:$24 sm:$0xf]
  %s347 = scalar_lea.vmem %s0, 193
  %v348 = vld [vmem:[%s347] ss:$24 sm:$0xf0]
  %vm349 = vcmask 1047556
  %v350 = vsel %vm349, %v348, %v346
  %s351 = scalar_lea.vmem %s0, 1
  %v352 = vld [vmem:[%s351] ss:$24 sm:$0xf]
  %s353 = scalar_lea.vmem %s0, 1
  %v354 = vld [vmem:[%s353] ss:$24 sm:$0xf0]
  %vm355 = vcmask 1047556
  %v356 = vsel %vm355, %v354, %v352
  %vm357 = vcmask 392192
  %v358 = vsel %vm357, %v356, %v350
  %359 = vrot.lane.b32.xlu0 %v358, 80
  %v360 = vpop.permute.xlu0 %359
  %vm361 = vcmask 261120
  %s362 = scalar_lea.vmem %s1, 128
  %363 = vst.msk [vmem:[%s362] sm:$0xff] %vm361, %v360
  %vm364 = vcmask 1048192
  %365 = vst.msk [vmem:[%s1] sm:$0xff] %vm364, %v360
  %s366 = scalar_lea.vmem %s0, 1
  %v367 = vld [vmem:[%s366] ss:$24 sm:$0xf]
  %s368 = scalar_lea.vmem %s0, 1
  %v369 = vld [vmem:[%s368] ss:$24 sm:$0xf0]
  %vm370 = vcmask 1047556
  %v371 = vsel %vm370, %v369, %v367
  %s372 = scalar_lea.vmem %s0, 201
  %v373 = vld [vmem:[%s372] ss:$24 sm:$0xf]
  %s374 = scalar_lea.vmem %s0, 201
  %v375 = vld [vmem:[%s374] ss:$24 sm:$0xf0]
  %vm376 = vcmask 1047556
  %v377 = vsel %vm376, %v375, %v373
  %vm378 = vcmask 392192
  %v379 = vsel %vm378, %v377, %v371
  %380 = vrot.lane.b32.xlu0 %v379, 80
  %v381 = vpop.permute.xlu0 %380
  %vm382 = vcmask 261120
  %s383 = scalar_lea.vmem %s1, 8
  %384 = vst.msk [vmem:[%s383] sm:$0xff] %vm382, %v381
  %vm385 = vcmask 1048192
  %s386 = scalar_lea.vmem %s1, 160
  %387 = vst.msk [vmem:[%s386] sm:$0xff] %vm385, %v381
  %s388 = scalar_lea.vmem %s0, 201
  %v389 = vld [vmem:[%s388] ss:$24 sm:$0xf]
  %s390 = scalar_lea.vmem %s0, 201
  %v391 = vld [vmem:[%s390] ss:$24 sm:$0xf0]
  %vm392 = vcmask 1047556
  %v393 = vsel %vm392, %v391, %v389
  %s394 = scalar_lea.vmem %s0, 9
  %v395 = vld [vmem:[%s394] ss:$24 sm:$0xf]
  %s396 = scalar_lea.vmem %s0, 9
  %v397 = vld [vmem:[%s396] ss:$24 sm:$0xf0]
  %vm398 = vcmask 1047556
  %v399 = vsel %vm398, %v397, %v395
  %vm400 = vcmask 392192
  %v401 = vsel %vm400, %v399, %v393
  %402 = vrot.lane.b32.xlu0 %v401, 80
  %v403 = vpop.permute.xlu0 %402
  %vm404 = vcmask 261120
  %s405 = scalar_lea.vmem %s1, 168
  %406 = vst.msk [vmem:[%s405] sm:$0xff] %vm404, %v403
  %vm407 = vcmask 1048192
  %s408 = scalar_lea.vmem %s1, 40
  %409 = vst.msk [vmem:[%s408] sm:$0xff] %vm407, %v403
  %s410 = scalar_lea.vmem %s0, 9
  %v411 = vld [vmem:[%s410] ss:$24 sm:$0xf]
  %s412 = scalar_lea.vmem %s0, 9
  %v413 = vld [vmem:[%s412] ss:$24 sm:$0xf0]
  %vm414 = vcmask 1047556
  %v415 = vsel %vm414, %v413, %v411
  %s416 = scalar_lea.vmem %s0, 209
  %v417 = vld [vmem:[%s416] ss:$24 sm:$0xf]
  %s418 = scalar_lea.vmem %s0, 209
  %v419 = vld [vmem:[%s418] ss:$24 sm:$0xf0]
  %vm420 = vcmask 1047556
  %v421 = vsel %vm420, %v419, %v417
  %vm422 = vcmask 392192
  %v423 = vsel %vm422, %v421, %v415
  %424 = vrot.lane.b32.xlu0 %v423, 80
  %v425 = vpop.permute.xlu0 %424
  %vm426 = vcmask 261120
  %s427 = scalar_lea.vmem %s1, 48
  %428 = vst.msk [vmem:[%s427] sm:$0xff] %vm426, %v425
  %vm429 = vcmask 1048192
  %s430 = scalar_lea.vmem %s1, 200
  %431 = vst.msk [vmem:[%s430] sm:$0xff] %vm429, %v425
  %s432 = scalar_lea.vmem %s0, 209
  %v433 = vld [vmem:[%s432] ss:$24 sm:$0xf]
  %s434 = scalar_lea.vmem %s0, 209
  %v435 = vld [vmem:[%s434] ss:$24 sm:$0xf0]
  %vm436 = vcmask 1047556
  %v437 = vsel %vm436, %v435, %v433
  %s438 = scalar_lea.vmem %s0, 17
  %v439 = vld [vmem:[%s438] ss:$24 sm:$0xf]
  %s440 = scalar_lea.vmem %s0, 17
  %v441 = vld [vmem:[%s440] ss:$24 sm:$0xf0]
  %vm442 = vcmask 1047556
  %v443 = vsel %vm442, %v441, %v439
  %vm444 = vcmask 392192
  %v445 = vsel %vm444, %v443, %v437
  %446 = vrot.lane.b32.xlu0 %v445, 80
  %v447 = vpop.permute.xlu0 %446
  %vm448 = vcmask 261120
  %s449 = scalar_lea.vmem %s1, 208
  %450 = vst.msk [vmem:[%s449] sm:$0xff] %vm448, %v447
  %vm451 = vcmask 1048192
  %s452 = scalar_lea.vmem %s1, 80
  %453 = vst.msk [vmem:[%s452] sm:$0xff] %vm451, %v447
  %s454 = scalar_lea.vmem %s0, 17
  %v455 = vld [vmem:[%s454] ss:$24 sm:$0xf]
  %s456 = scalar_lea.vmem %s0, 17
  %v457 = vld [vmem:[%s456] ss:$24 sm:$0xf0]
  %vm458 = vcmask 1047556
  %v459 = vsel %vm458, %v457, %v455
  %s460 = scalar_lea.vmem %s0, 193
  %v461 = vld [vmem:[%s460] ss:$24 sm:$0xf]
  %s462 = scalar_lea.vmem %s0, 193
  %v463 = vld [vmem:[%s462] ss:$24 sm:$0xf0]
  %vm464 = vcmask 1047556
  %v465 = vsel %vm464, %v463, %v461
  %vm466 = vcmask 392192
  %v467 = vsel %vm466, %v465, %v459
  %468 = vrot.lane.b32.xlu0 %v467, 80
  %v469 = vpop.permute.xlu0 %468
  %vm470 = vcmask 261120
  %s471 = scalar_lea.vmem %s1, 88
  %472 = vst.msk [vmem:[%s471] sm:$0xff] %vm470, %v469
  %vm473 = vcmask 1048192
  %s474 = scalar_lea.vmem %s1, 120
  %475 = vst.msk [vmem:[%s474] sm:$0xff] %vm473, %v469
  %s476 = scalar_lea.vmem %s0, 12
  %v477 = vld [vmem:[%s476] ss:$24 sm:$0xf]
  %s478 = scalar_lea.vmem %s0, 12
  %v479 = vld [vmem:[%s478] ss:$24 sm:$0xf0]
  %vm480 = vcmask 1047556
  %v481 = vsel %vm480, %v479, %v477
  %s482 = scalar_lea.vmem %s0, 20
  %v483 = vld [vmem:[%s482] ss:$24 sm:$0xf]
  %s484 = scalar_lea.vmem %s0, 20
  %v485 = vld [vmem:[%s484] ss:$24 sm:$0xf0]
  %vm486 = vcmask 1047556
  %v487 = vsel %vm486, %v485, %v483
  %vm488 = vcmask 523264
  %v489 = vsel %vm488, %v487, %v481
  %490 = vrot.lane.b32.xlu0 %v489, 64
  %v491 = vpop.permute.xlu0 %490
  %vm492 = vcmask 130048
  %s493 = scalar_lea.vmem %s1, 64
  %494 = vst.msk [vmem:[%s493] sm:$0xff] %vm492, %v491
  %vm495 = vcmask 1048064
  %s496 = scalar_lea.vmem %s1, 96
  %497 = vst.msk [vmem:[%s496] sm:$0xff] %vm495, %v491
  %s498 = scalar_lea.vmem %s0, 212
  %v499 = vld [vmem:[%s498] ss:$24 sm:$0xf]
  %s500 = scalar_lea.vmem %s0, 212
  %v501 = vld [vmem:[%s500] ss:$24 sm:$0xf0]
  %vm502 = vcmask 1047556
  %v503 = vsel %vm502, %v501, %v499
  %s504 = scalar_lea.vmem %s0, 196
  %v505 = vld [vmem:[%s504] ss:$24 sm:$0xf]
  %s506 = scalar_lea.vmem %s0, 196
  %v507 = vld [vmem:[%s506] ss:$24 sm:$0xf0]
  %vm508 = vcmask 1047556
  %v509 = vsel %vm508, %v507, %v505
  %vm510 = vcmask 523264
  %v511 = vsel %vm510, %v509, %v503
  %512 = vrot.lane.b32.xlu0 %v511, 64
  %v513 = vpop.permute.xlu0 %512
  %vm514 = vcmask 130048
  %s515 = scalar_lea.vmem %s1, 224
  %516 = vst.msk [vmem:[%s515] sm:$0xff] %vm514, %v513
  %vm517 = vcmask 1048064
  %s518 = scalar_lea.vmem %s1, 136
  %519 = vst.msk [vmem:[%s518] sm:$0xff] %vm517, %v513
  %s520 = scalar_lea.vmem %s0, 20
  %v521 = vld [vmem:[%s520] ss:$24 sm:$0xf]
  %s522 = scalar_lea.vmem %s0, 20
  %v523 = vld [vmem:[%s522] ss:$24 sm:$0xf0]
  %vm524 = vcmask 1047556
  %v525 = vsel %vm524, %v523, %v521
  %s526 = scalar_lea.vmem %s0, 4
  %v527 = vld [vmem:[%s526] ss:$24 sm:$0xf]
  %s528 = scalar_lea.vmem %s0, 4
  %v529 = vld [vmem:[%s528] ss:$24 sm:$0xf0]
  %vm530 = vcmask 1047556
  %v531 = vsel %vm530, %v529, %v527
  %vm532 = vcmask 523264
  %v533 = vsel %vm532, %v531, %v525
  %534 = vrot.lane.b32.xlu0 %v533, 64
  %v535 = vpop.permute.xlu0 %534
  %vm536 = vcmask 130048
  %s537 = scalar_lea.vmem %s1, 104
  %538 = vst.msk [vmem:[%s537] sm:$0xff] %vm536, %v535
  %vm539 = vcmask 1048064
  %s540 = scalar_lea.vmem %s1, 16
  %541 = vst.msk [vmem:[%s540] sm:$0xff] %vm539, %v535
  %s542 = scalar_lea.vmem %s0, 196
  %v543 = vld [vmem:[%s542] ss:$24 sm:$0xf]
  %s544 = scalar_lea.vmem %s0, 196
  %v545 = vld [vmem:[%s544] ss:$24 sm:$0xf0]
  %vm546 = vcmask 1047556
  %v547 = vsel %vm546, %v545, %v543
  %s548 = scalar_lea.vmem %s0, 204
  %v549 = vld [vmem:[%s548] ss:$24 sm:$0xf]
  %s550 = scalar_lea.vmem %s0, 204
  %v551 = vld [vmem:[%s550] ss:$24 sm:$0xf0]
  %vm552 = vcmask 1047556
  %v553 = vsel %vm552, %v551, %v549
  %vm554 = vcmask 523264
  %v555 = vsel %vm554, %v553, %v547
  %556 = vrot.lane.b32.xlu0 %v555, 64
  %v557 = vpop.permute.xlu0 %556
  %vm558 = vcmask 130048
  %s559 = scalar_lea.vmem %s1, 144
  %560 = vst.msk [vmem:[%s559] sm:$0xff] %vm558, %v557
  %vm561 = vcmask 1048064
  %s562 = scalar_lea.vmem %s1, 176
  %563 = vst.msk [vmem:[%s562] sm:$0xff] %vm561, %v557
  %s564 = scalar_lea.vmem %s0, 4
  %v565 = vld [vmem:[%s564] ss:$24 sm:$0xf]
  %s566 = scalar_lea.vmem %s0, 4
  %v567 = vld [vmem:[%s566] ss:$24 sm:$0xf0]
  %vm568 = vcmask 1047556
  %v569 = vsel %vm568, %v567, %v565
  %s570 = scalar_lea.vmem %s0, 12
  %v571 = vld [vmem:[%s570] ss:$24 sm:$0xf]
  %s572 = scalar_lea.vmem %s0, 12
  %v573 = vld [vmem:[%s572] ss:$24 sm:$0xf0]
  %vm574 = vcmask 1047556
  %v575 = vsel %vm574, %v573, %v571
  %vm576 = vcmask 523264
  %v577 = vsel %vm576, %v575, %v569
  %578 = vrot.lane.b32.xlu0 %v577, 64
  %v579 = vpop.permute.xlu0 %578
  %vm580 = vcmask 130048
  %s581 = scalar_lea.vmem %s1, 24
  %582 = vst.msk [vmem:[%s581] sm:$0xff] %vm580, %v579
  %vm583 = vcmask 1048064
  %s584 = scalar_lea.vmem %s1, 56
  %585 = vst.msk [vmem:[%s584] sm:$0xff] %vm583, %v579
  %s586 = scalar_lea.vmem %s0, 204
  %v587 = vld [vmem:[%s586] ss:$24 sm:$0xf]
  %s588 = scalar_lea.vmem %s0, 204
  %v589 = vld [vmem:[%s588] ss:$24 sm:$0xf0]
  %vm590 = vcmask 1047556
  %v591 = vsel %vm590, %v589, %v587
  %s592 = scalar_lea.vmem %s0, 212
  %v593 = vld [vmem:[%s592] ss:$24 sm:$0xf]
  %s594 = scalar_lea.vmem %s0, 212
  %v595 = vld [vmem:[%s594] ss:$24 sm:$0xf0]
  %vm596 = vcmask 1047556
  %v597 = vsel %vm596, %v595, %v593
  %vm598 = vcmask 523264
  %v599 = vsel %vm598, %v597, %v591
  %600 = vrot.lane.b32.xlu0 %v599, 64
  %v601 = vpop.permute.xlu0 %600
  %vm602 = vcmask 130048
  %s603 = scalar_lea.vmem %s1, 184
  %604 = vst.msk [vmem:[%s603] sm:$0xff] %vm602, %v601
  %vm605 = vcmask 1048064
  %s606 = scalar_lea.vmem %s1, 216
  %607 = vst.msk [vmem:[%s606] sm:$0xff] %vm605, %v601
  %s608 = scalar_lea.vmem %s0, 7
  %v609 = vld [vmem:[%s608] ss:$24 sm:$0xf]
  %s610 = scalar_lea.vmem %s0, 7
  %v611 = vld [vmem:[%s610] ss:$24 sm:$0xf0]
  %vm612 = vcmask 1047556
  %v613 = vsel %vm612, %v611, %v609
  %614 = vrot.lane.b32.xlu0 %v613, 48
  %v615 = vpop.permute.xlu0 %614
  %vm616 = vcmask 1047936
  %s617 = scalar_lea.vmem %s1, 32
  %618 = vst.msk [vmem:[%s617] sm:$0xff] %vm616, %v615
  %s619 = scalar_lea.vmem %s0, 207
  %v620 = vld [vmem:[%s619] ss:$24 sm:$0xf]
  %s621 = scalar_lea.vmem %s0, 207
  %v622 = vld [vmem:[%s621] ss:$24 sm:$0xf0]
  %vm623 = vcmask 1047556
  %v624 = vsel %vm623, %v622, %v620
  %625 = vrot.lane.b32.xlu0 %v624, 48
  %v626 = vpop.permute.xlu0 %625
  %vm627 = vcmask 1047936
  %s628 = scalar_lea.vmem %s1, 192
  %629 = vst.msk [vmem:[%s628] sm:$0xff] %vm627, %v626
  %s630 = scalar_lea.vmem %s0, 15
  %v631 = vld [vmem:[%s630] ss:$24 sm:$0xf]
  %s632 = scalar_lea.vmem %s0, 15
  %v633 = vld [vmem:[%s632] ss:$24 sm:$0xf0]
  %vm634 = vcmask 1047556
  %v635 = vsel %vm634, %v633, %v631
  %636 = vrot.lane.b32.xlu0 %v635, 48
  %v637 = vpop.permute.xlu0 %636
  %vm638 = vcmask 1047936
  %s639 = scalar_lea.vmem %s1, 72
  %640 = vst.msk [vmem:[%s639] sm:$0xff] %vm638, %v637
  %s641 = scalar_lea.vmem %s0, 215
  %v642 = vld [vmem:[%s641] ss:$24 sm:$0xf]
  %s643 = scalar_lea.vmem %s0, 215
  %v644 = vld [vmem:[%s643] ss:$24 sm:$0xf0]
  %vm645 = vcmask 1047556
  %v646 = vsel %vm645, %v644, %v642
  %647 = vrot.lane.b32.xlu0 %v646, 48
  %v648 = vpop.permute.xlu0 %647
  %vm649 = vcmask 1047936
  %s650 = scalar_lea.vmem %s1, 232
  %651 = vst.msk [vmem:[%s650] sm:$0xff] %vm649, %v648
  %s652 = scalar_lea.vmem %s0, 23
  %v653 = vld [vmem:[%s652] ss:$24 sm:$0xf]
  %s654 = scalar_lea.vmem %s0, 23
  %v655 = vld [vmem:[%s654] ss:$24 sm:$0xf0]
  %vm656 = vcmask 1047556
  %v657 = vsel %vm656, %v655, %v653
  %658 = vrot.lane.b32.xlu0 %v657, 48
  %v659 = vpop.permute.xlu0 %658
  %vm660 = vcmask 1047936
  %s661 = scalar_lea.vmem %s1, 112
  %662 = vst.msk [vmem:[%s661] sm:$0xff] %vm660, %v659
  %s663 = scalar_lea.vmem %s0, 199
  %v664 = vld [vmem:[%s663] ss:$24 sm:$0xf]
  %s665 = scalar_lea.vmem %s0, 199
  %v666 = vld [vmem:[%s665] ss:$24 sm:$0xf0]
  %vm667 = vcmask 1047556
  %v668 = vsel %vm667, %v666, %v664
  %669 = vrot.lane.b32.xlu0 %v668, 48
  %v670 = vpop.permute.xlu0 %669
  %vm671 = vcmask 1047936
  %s672 = scalar_lea.vmem %s1, 152
  %673 = vst.msk [vmem:[%s672] sm:$0xff] %vm671, %v670
  %s674 = scalar_lea.vmem %s0, 194
  %v675 = vld [vmem:[%s674] ss:$24 sm:$0xf]
  %s676 = scalar_lea.vmem %s0, 194
  %v677 = vld [vmem:[%s676] ss:$24 sm:$0xf0]
  %vm678 = vcmask 1047556
  %v679 = vsel %vm678, %v677, %v675
  %680 = vrot.lane.b32.xlu0 %v679, 32
  %v681 = vpop.permute.xlu0 %680
  %vm682 = vcmask 916736
  %s683 = scalar_lea.vmem %s1, 128
  %684 = vst.msk [vmem:[%s683] sm:$0xff] %vm682, %v681
  %s685 = scalar_lea.vmem %s0, 2
  %v686 = vld [vmem:[%s685] ss:$24 sm:$0xf]
  %s687 = scalar_lea.vmem %s0, 2
  %v688 = vld [vmem:[%s687] ss:$24 sm:$0xf0]
  %vm689 = vcmask 1047556
  %v690 = vsel %vm689, %v688, %v686
  %691 = vrot.lane.b32.xlu0 %v690, 32
  %v692 = vpop.permute.xlu0 %691
  %vm693 = vcmask 916736
  %s694 = scalar_lea.vmem %s1, 8
  %695 = vst.msk [vmem:[%s694] sm:$0xff] %vm693, %v692
  %s696 = scalar_lea.vmem %s0, 202
  %v697 = vld [vmem:[%s696] ss:$24 sm:$0xf]
  %s698 = scalar_lea.vmem %s0, 202
  %v699 = vld [vmem:[%s698] ss:$24 sm:$0xf0]
  %vm700 = vcmask 1047556
  %v701 = vsel %vm700, %v699, %v697
  %702 = vrot.lane.b32.xlu0 %v701, 32
  %v703 = vpop.permute.xlu0 %702
  %vm704 = vcmask 916736
  %s705 = scalar_lea.vmem %s1, 168
  %706 = vst.msk [vmem:[%s705] sm:$0xff] %vm704, %v703
  %s707 = scalar_lea.vmem %s0, 10
  %v708 = vld [vmem:[%s707] ss:$24 sm:$0xf]
  %s709 = scalar_lea.vmem %s0, 10
  %v710 = vld [vmem:[%s709] ss:$24 sm:$0xf0]
  %vm711 = vcmask 1047556
  %v712 = vsel %vm711, %v710, %v708
  %713 = vrot.lane.b32.xlu0 %v712, 32
  %v714 = vpop.permute.xlu0 %713
  %vm715 = vcmask 916736
  %s716 = scalar_lea.vmem %s1, 48
  %717 = vst.msk [vmem:[%s716] sm:$0xff] %vm715, %v714
  %s718 = scalar_lea.vmem %s0, 210
  %v719 = vld [vmem:[%s718] ss:$24 sm:$0xf]
  %s720 = scalar_lea.vmem %s0, 210
  %v721 = vld [vmem:[%s720] ss:$24 sm:$0xf0]
  %vm722 = vcmask 1047556
  %v723 = vsel %vm722, %v721, %v719
  %724 = vrot.lane.b32.xlu0 %v723, 32
  %v725 = vpop.permute.xlu0 %724
  %vm726 = vcmask 916736
  %s727 = scalar_lea.vmem %s1, 208
  %728 = vst.msk [vmem:[%s727] sm:$0xff] %vm726, %v725
  %s729 = scalar_lea.vmem %s0, 18
  %v730 = vld [vmem:[%s729] ss:$24 sm:$0xf]
  %s731 = scalar_lea.vmem %s0, 18
  %v732 = vld [vmem:[%s731] ss:$24 sm:$0xf0]
  %vm733 = vcmask 1047556
  %v734 = vsel %vm733, %v732, %v730
  %735 = vrot.lane.b32.xlu0 %v734, 32
  %v736 = vpop.permute.xlu0 %735
  %vm737 = vcmask 916736
  %s738 = scalar_lea.vmem %s1, 88
  %739 = vst.msk [vmem:[%s738] sm:$0xff] %vm737, %v736
  %s740 = scalar_lea.vmem %s0, 13
  %v741 = vld [vmem:[%s740] ss:$24 sm:$0xf]
  %s742 = scalar_lea.vmem %s0, 13
  %v743 = vld [vmem:[%s742] ss:$24 sm:$0xf0]
  %vm744 = vcmask 1047556
  %v745 = vsel %vm744, %v743, %v741
  %746 = vrot.lane.b32.xlu0 %v745, 16
  %v747 = vpop.permute.xlu0 %746
  %vm748 = vcmask 785536
  %s749 = scalar_lea.vmem %s1, 64
  %750 = vst.msk [vmem:[%s749] sm:$0xff] %vm748, %v747
  %s751 = scalar_lea.vmem %s0, 213
  %v752 = vld [vmem:[%s751] ss:$24 sm:$0xf]
  %s753 = scalar_lea.vmem %s0, 213
  %v754 = vld [vmem:[%s753] ss:$24 sm:$0xf0]
  %vm755 = vcmask 1047556
  %v756 = vsel %vm755, %v754, %v752
  %757 = vrot.lane.b32.xlu0 %v756, 16
  %v758 = vpop.permute.xlu0 %757
  %vm759 = vcmask 785536
  %s760 = scalar_lea.vmem %s1, 224
  %761 = vst.msk [vmem:[%s760] sm:$0xff] %vm759, %v758
  %s762 = scalar_lea.vmem %s0, 21
  %v763 = vld [vmem:[%s762] ss:$24 sm:$0xf]
  %s764 = scalar_lea.vmem %s0, 21
  %v765 = vld [vmem:[%s764] ss:$24 sm:$0xf0]
  %vm766 = vcmask 1047556
  %v767 = vsel %vm766, %v765, %v763
  %768 = vrot.lane.b32.xlu0 %v767, 16
  %v769 = vpop.permute.xlu0 %768
  %vm770 = vcmask 785536
  %s771 = scalar_lea.vmem %s1, 104
  %772 = vst.msk [vmem:[%s771] sm:$0xff] %vm770, %v769
  %s773 = scalar_lea.vmem %s0, 197
  %v774 = vld [vmem:[%s773] ss:$24 sm:$0xf]
  %s775 = scalar_lea.vmem %s0, 197
  %v776 = vld [vmem:[%s775] ss:$24 sm:$0xf0]
  %vm777 = vcmask 1047556
  %v778 = vsel %vm777, %v776, %v774
  %779 = vrot.lane.b32.xlu0 %v778, 16
  %v780 = vpop.permute.xlu0 %779
  %vm781 = vcmask 785536
  %s782 = scalar_lea.vmem %s1, 144
  %783 = vst.msk [vmem:[%s782] sm:$0xff] %vm781, %v780
  %s784 = scalar_lea.vmem %s0, 5
  %v785 = vld [vmem:[%s784] ss:$24 sm:$0xf]
  %s786 = scalar_lea.vmem %s0, 5
  %v787 = vld [vmem:[%s786] ss:$24 sm:$0xf0]
  %vm788 = vcmask 1047556
  %v789 = vsel %vm788, %v787, %v785
  %790 = vrot.lane.b32.xlu0 %v789, 16
  %v791 = vpop.permute.xlu0 %790
  %vm792 = vcmask 785536
  %s793 = scalar_lea.vmem %s1, 24
  %794 = vst.msk [vmem:[%s793] sm:$0xff] %vm792, %v791
  %s795 = scalar_lea.vmem %s0, 205
  %v796 = vld [vmem:[%s795] ss:$24 sm:$0xf]
  %s797 = scalar_lea.vmem %s0, 205
  %v798 = vld [vmem:[%s797] ss:$24 sm:$0xf0]
  %vm799 = vcmask 1047556
  %v800 = vsel %vm799, %v798, %v796
  %801 = vrot.lane.b32.xlu0 %v800, 16
  %v802 = vpop.permute.xlu0 %801
  %vm803 = vcmask 785536
  %s804 = scalar_lea.vmem %s1, 184
  %805 = vst.msk [vmem:[%s804] sm:$0xff] %vm803, %v802

// kernel: s3im_loss.1
$region0: #{s3im_loss.1}
  #allocation0 [shape = 'u32[]', space=smem, size = 0x4, offset = 0x4, fixed_abs, tag = 'smem constant byte address 0x4 - core index']
  #allocation1 [shape = 'u32[144,128]{1,0:T(1,128)}', space=vmem, size = 0x12000, scoped, tag = 'internal scratch']
  %s0 = inlined_call_operand.vmem [shape: f32[16,1], index: 0, kind: input, shape index: {}]
  %s1 = inlined_call_operand.vmem [shape: f32[16,1920], index: 1, kind: input, shape index: {}]
  %s2 = inlined_call_operand.vmem [shape: f32[16,1920], index: 2, kind: input, shape index: {}]
  %s3 = inlined_call_operand.hbm [shape: f32[1,1], index: 3, kind: output, shape index: {}]
  %s4 = sld [smem:[#allocation0]]
  $region99: #{s3im_loss.1} parent=0
    _
  %s6 = ssub.s32 1, %s4
  %s7 = scalar_select 0, %s6, %s4
  $region1: #{s3im_loss.1} parent=0
    #allocation2 [shape = 'u8[49152]{0}', space=vmem, size = 0xc000, scoped, tag = 'input window, operand 1']
    #allocation3 [shape = 'u8[49152]{0}', space=vmem, size = 0xc000, scoped, tag = 'input window, operand 2']
    #allocation4 [shape = 'u8[512]{0}', space=vmem, size = 0x400, scoped, tag = 'output window, operand 0, single buffered']
    #allocation5 [shape = 's32[2]{0}', space=sflag, size = 0x8, scoped, tag = 'scoped memory for s3im_loss.1']
    %8 = vsyncpa [#allocation5], 0
    loop: start=0, step=1, limit=7
    $region2: #{s3im_loss.1} parent=1 // loop_pre_header
      _
    $region3: #{s3im_loss.1} parent=1 // loop_header
      %s10 = sphi 0, %s14
      %p11 = scmp.ge.s32.totalorder %s10, 7
      %s18 = sphi 0, %s18
      %s20 = sphi 0, %s18
      %s21 = sphi 0, %s20
      %s35 = sphi 0, %s21
      %s41 = sphi 0, %s43
      %s44 = sphi 0, %s41
      %s45 = sphi 0, %s44
      %s61 = sphi 0, %s45
      %s67 = sphi 0, %s69
      %s70 = sphi 0, %s67
      %s71 = sphi 0, %s70
      %s87 = sphi 0, %s71
      %s91 = sphi 0, %s91
      %s93 = sphi 0, %s91
      %s94 = sphi 0, %s93
      %s108 = sphi 0, %s94
    $region4: #{s3im_loss.1} parent=1 // loop_header_branch
      %13 = sbr.rel (%p11) target = $region8
    $region5: #{s3im_loss.1} parent=1 // loop_body
      %s15 = ssub.s32 %s10, 1
      %s16 = ssub.s32 %s10, 2
      %s17 = sadd.s32 %s10, 1
      %s19 = sadd.s32 %s18, 1
      %p22 = scmp.eq.s32.totalorder %s10, 4
      %p23 = scmp.ne.s32.totalorder %s18, %s20
      %p24 = scmp.eq.s32.totalorder %s10, 0
      %p25 = por %p23, %p24
      %p26 = scmp.ne.s32.totalorder %s18, %s20
      %p27 = scmp.eq.s32.totalorder %s15, 4
      %p28 = por %p26, %p27
      %p29 = scmp.ne.s32.totalorder %s20, %s21
      %p30 = scmp.eq.s32.totalorder %s15, 0
      %p31 = por %p29, %p30
      %p32 = scmp.ne.s32.totalorder %s20, %s21
      %p33 = scmp.eq.s32.totalorder %s16, 4
      %p34 = por %p32, %p33
      %p36 = scmp.ne.s32.totalorder %s21, %s35
      %p37 = scmp.eq.s32.totalorder %s16, 0
      %p38 = por %p36, %p37
      %s39 = ssub.s32 %s10, %s17
      %p40 = scmp.eq.s32.totalorder %s39, 0
      %s42 = sadd.s32 %s41, 1
      %s43 = scalar_select %p40, %s41, %s42
      %p46 = pneg %p40
      %p47 = scmp.eq.s32.totalorder %s10, 4
      %p48 = por %p46, %p47
      %p49 = scmp.ne.s32.totalorder %s41, %s44
      %p50 = scmp.eq.s32.totalorder %s10, 0
      %p51 = por %p49, %p50
      %p52 = scmp.ne.s32.totalorder %s41, %s44
      %p53 = scmp.eq.s32.totalorder %s15, 4
      %p54 = por %p52, %p53
      %p55 = scmp.ne.s32.totalorder %s44, %s45
      %p56 = scmp.eq.s32.totalorder %s15, 0
      %p57 = por %p55, %p56
      %p58 = scmp.ne.s32.totalorder %s44, %s45
      %p59 = scmp.eq.s32.totalorder %s16, 4
      %p60 = por %p58, %p59
      %p62 = scmp.ne.s32.totalorder %s45, %s61
      %p63 = scmp.eq.s32.totalorder %s16, 0
      %p64 = por %p62, %p63
      %s65 = ssub.s32 %s10, %s17
      %p66 = scmp.eq.s32.totalorder %s65, 0
      %s68 = sadd.s32 %s67, 1
      %s69 = scalar_select %p66, %s67, %s68
      %p72 = pneg %p66
      %p73 = scmp.eq.s32.totalorder %s10, 4
      %p74 = por %p72, %p73
      %p75 = scmp.ne.s32.totalorder %s67, %s70
      %p76 = scmp.eq.s32.totalorder %s10, 0
      %p77 = por %p75, %p76
      %p78 = scmp.ne.s32.totalorder %s67, %s70
      %p79 = scmp.eq.s32.totalorder %s15, 4
      %p80 = por %p78, %p79
      %p81 = scmp.ne.s32.totalorder %s70, %s71
      %p82 = scmp.eq.s32.totalorder %s15, 0
      %p83 = por %p81, %p82
      %p84 = scmp.ne.s32.totalorder %s70, %s71
      %p85 = scmp.eq.s32.totalorder %s16, 4
      %p86 = por %p84, %p85
      %p88 = scmp.ne.s32.totalorder %s71, %s87
      %p89 = scmp.eq.s32.totalorder %s16, 0
      %p90 = por %p88, %p89
      %s92 = sadd.s32 %s91, 1
      %p95 = scmp.eq.s32.totalorder %s10, 4
      %p96 = scmp.ne.s32.totalorder %s91, %s93
      %p97 = scmp.eq.s32.totalorder %s10, 0
      %p98 = por %p96, %p97
      %p99 = scmp.ne.s32.totalorder %s91, %s93
      %p100 = scmp.eq.s32.totalorder %s15, 4
      %p101 = por %p99, %p100
      %p102 = scmp.ne.s32.totalorder %s93, %s94
      %p103 = scmp.eq.s32.totalorder %s15, 0
      %p104 = por %p102, %p103
      %p105 = scmp.ne.s32.totalorder %s93, %s94
      %p106 = scmp.eq.s32.totalorder %s16, 4
      %p107 = por %p105, %p106
      %p109 = scmp.ne.s32.totalorder %s94, %s108
      %p110 = scmp.eq.s32.totalorder %s16, 0
      %p111 = por %p109, %p110
      %p112 = scmp.le.s32.totalorder 1, %s10
      %p113 = scmp.lt.s32.totalorder %s10, 6
      %p114 = pnand %p112, %p113
      %p115 = pneg %p114
      // Predicated region
      $region9: #{s3im_loss.1} parent=5 // pred_check
        _
      $region10: #{s3im_loss.1} parent=5 // pred_check_branch
        %117 = sbr.rel (%p114) target = $region12
      $region11: #{s3im_loss.1} parent=5 // pred_region
        %s118 = ssub.s32 %s10, 1
        // Predicated region
        $region13: #{s3im_loss.1} parent=11 // pred_check
          %p119 = pneg %p31
        $region14: #{s3im_loss.1} parent=11 // pred_check_branch
          %121 = sbr.rel (%p119) target = $region16
        $region15: #{s3im_loss.1} parent=11 // pred_region
          _
        $region16: #{s3im_loss.1} parent=11 // pred_fallthru
          _
      $region12: #{s3im_loss.1} parent=5 // pred_fallthru
        _
      %p122 = scmp.lt.s32.totalorder %s10, 5
      // Predicated region
      $region17: #{s3im_loss.1} parent=5 // pred_check
        %p123 = pneg %p122
      $region18: #{s3im_loss.1} parent=5 // pred_check_branch
        %125 = sbr.rel (%p123) target = $region20
      $region19: #{s3im_loss.1} parent=5 // pred_region
        // Predicated region
        $region21: #{s3im_loss.1} parent=19 // pred_check
          %p126 = pneg %p51
        $region22: #{s3im_loss.1} parent=19 // pred_check_branch
          %128 = sbr.rel (%p126) target = $region24
        $region23: #{s3im_loss.1} parent=19 // pred_region
          %s129 = sand.u32 %s41, 1
          %s130 = sand.u32 %s41, 1
          %s131 = smul.addr %s130, 48
          %s132 = scalar_lea.vmem [#allocation2], %s131
          %s133 = smul.u32 3, %s10
          %s134 = smul.addr %s133, 8
          %s135 = scalar_lea.vmem %s1, %s134
          // Predicated region
          $region25: #{s3im_loss.1} parent=23 // pred_check
            _
          $region26: #{s3im_loss.1} parent=23 // pred_check_branch
            %137 = sbr.rel (0) target = $region28
          $region27: #{s3im_loss.1} parent=23 // pred_region
            // Predicated region
            $region29: #{s3im_loss.1} parent=27 // pred_check
              _
            $region30: #{s3im_loss.1} parent=27 // pred_check_branch
              %139 = sbr.rel (0) target = $region32
            $region31: #{s3im_loss.1} parent=27 // pred_region
              loop: start=0, step=1, limit=1
              $region33: #{s3im_loss.1} parent=31 // loop_pre_header
                _
              $region34: #{s3im_loss.1} parent=31 // loop_header
                %s141 = sphi 0, %s145
                %p142 = scmp.ge.s32.totalorder %s141, 1
                %s146 = sphi %s135, %s135
                %s147 = sphi %s132, %s132
              $region35: #{s3im_loss.1} parent=31 // loop_header_branch
                %144 = sbr.rel (%p142) target = $region39
              $region36: #{s3im_loss.1} parent=31 // loop_body
                %v148 = vld [vmem:[%s146] sm:$0xff]
                %149 = vst [vmem:[%s147] sm:$0xff] %v148
                %v150 = vld [vmem:[%s146 + $0x8] sm:$0xff]
                %151 = vst [vmem:[%s147 + $0x8] sm:$0xff] %v150
                %v152 = vld [vmem:[%s146 + $0x10] sm:$0xff]
                %153 = vst [vmem:[%s147 + $0x10] sm:$0xff] %v152
                %v154 = vld [vmem:[%s146 + $0x78] sm:$0xff]
                %155 = vst [vmem:[%s147 + $0x18] sm:$0xff] %v154
                %v156 = vld [vmem:[%s146 + $0x80] sm:$0xff]
                %157 = vst [vmem:[%s147 + $0x20] sm:$0xff] %v156
                %v158 = vld [vmem:[%s146 + $0x88] sm:$0xff]
                %159 = vst [vmem:[%s147 + $0x28] sm:$0xff] %v158
              $region37: #{s3im_loss.1} parent=31 // loop_footer
                %s145 = sadd.s32 1, %s141
              $region38: #{s3im_loss.1} parent=31 // loop_footer_branch
                %140 = sbr.rel target = $region34
              $region39: #{s3im_loss.1} parent=31 // loop_exit
                _
            $region32: #{s3im_loss.1} parent=27 // pred_fallthru
              _
            // Predicated region
            $region40: #{s3im_loss.1} parent=27 // pred_check
              _
            $region41: #{s3im_loss.1} parent=27 // pred_check_branch
              %161 = sbr.rel target = $region43
            $region42: #{s3im_loss.1} parent=27 // pred_region
              _
            $region43: #{s3im_loss.1} parent=27 // pred_fallthru
              _
          $region28: #{s3im_loss.1} parent=23 // pred_fallthru
            _
          %162 = vnop
        $region24: #{s3im_loss.1} parent=19 // pred_fallthru
          _
        // Predicated region
        $region44: #{s3im_loss.1} parent=19 // pred_check
          %p163 = pneg %p77
        $region45: #{s3im_loss.1} parent=19 // pred_check_branch
          %165 = sbr.rel (%p163) target = $region47
        $region46: #{s3im_loss.1} parent=19 // pred_region
          %s166 = sand.u32 %s67, 1
          %s167 = sand.u32 %s67, 1
          %s168 = smul.addr %s167, 48
          %s169 = scalar_lea.vmem [#allocation3], %s168
          %s170 = smul.u32 3, %s10
          %s171 = smul.addr %s170, 8
          %s172 = scalar_lea.vmem %s2, %s171
          // Predicated region
          $region48: #{s3im_loss.1} parent=46 // pred_check
            _
          $region49: #{s3im_loss.1} parent=46 // pred_check_branch
            %174 = sbr.rel (0) target = $region51
          $region50: #{s3im_loss.1} parent=46 // pred_region
            // Predicated region
            $region52: #{s3im_loss.1} parent=50 // pred_check
              _
            $region53: #{s3im_loss.1} parent=50 // pred_check_branch
              %176 = sbr.rel (0) target = $region55
            $region54: #{s3im_loss.1} parent=50 // pred_region
              loop: start=0, step=1, limit=1
              $region56: #{s3im_loss.1} parent=54 // loop_pre_header
                _
              $region57: #{s3im_loss.1} parent=54 // loop_header
                %s178 = sphi 0, %s182
                %p179 = scmp.ge.s32.totalorder %s178, 1
                %s183 = sphi %s172, %s172
                %s184 = sphi %s169, %s169
              $region58: #{s3im_loss.1} parent=54 // loop_header_branch
                %181 = sbr.rel (%p179) target = $region62
              $region59: #{s3im_loss.1} parent=54 // loop_body
                %v185 = vld [vmem:[%s183] sm:$0xff]
                %186 = vst [vmem:[%s184] sm:$0xff] %v185
                %v187 = vld [vmem:[%s183 + $0x8] sm:$0xff]
                %188 = vst [vmem:[%s184 + $0x8] sm:$0xff] %v187
                %v189 = vld [vmem:[%s183 + $0x10] sm:$0xff]
                %190 = vst [vmem:[%s184 + $0x10] sm:$0xff] %v189
                %v191 = vld [vmem:[%s183 + $0x78] sm:$0xff]
                %192 = vst [vmem:[%s184 + $0x18] sm:$0xff] %v191
                %v193 = vld [vmem:[%s183 + $0x80] sm:$0xff]
                %194 = vst [vmem:[%s184 + $0x20] sm:$0xff] %v193
                %v195 = vld [vmem:[%s183 + $0x88] sm:$0xff]
                %196 = vst [vmem:[%s184 + $0x28] sm:$0xff] %v195
              $region60: #{s3im_loss.1} parent=54 // loop_footer
                %s182 = sadd.s32 1, %s178
              $region61: #{s3im_loss.1} parent=54 // loop_footer_branch
                %177 = sbr.rel target = $region57
              $region62: #{s3im_loss.1} parent=54 // loop_exit
                _
            $region55: #{s3im_loss.1} parent=50 // pred_fallthru
              _
            // Predicated region
            $region63: #{s3im_loss.1} parent=50 // pred_check
              _
            $region64: #{s3im_loss.1} parent=50 // pred_check_branch
              %198 = sbr.rel target = $region66
            $region65: #{s3im_loss.1} parent=50 // pred_region
              _
            $region66: #{s3im_loss.1} parent=50 // pred_fallthru
              _
          $region51: #{s3im_loss.1} parent=46 // pred_fallthru
            _
          %199 = vnop
        $region47: #{s3im_loss.1} parent=19 // pred_fallthru
          _
      $region20: #{s3im_loss.1} parent=5 // pred_fallthru
        _
      %p200 = scmp.le.s32.totalorder 1, %s10
      %p201 = scmp.lt.s32.totalorder %s10, 6
      %p202 = pnand %p200, %p201
      %p203 = pneg %p202
      // Predicated region
      $region67: #{s3im_loss.1} parent=5 // pred_check
        _
      $region68: #{s3im_loss.1} parent=5 // pred_check_branch
        %205 = sbr.rel (%p202) target = $region70
      $region69: #{s3im_loss.1} parent=5 // pred_region
        %s206 = ssub.s32 %s10, 1
        %s207 = sand.u32 %s44, 1
        %s208 = sand.u32 %s44, 1
        %s209 = smul.addr %s208, 48
        %s210 = scalar_lea.vmem [#allocation2], %s209
        // Predicated region
        $region71: #{s3im_loss.1} parent=69 // pred_check
          %p211 = pneg %p57
        $region72: #{s3im_loss.1} parent=69 // pred_check_branch
          %213 = sbr.rel (%p211) target = $region74
        $region73: #{s3im_loss.1} parent=69 // pred_region
          _
        $region74: #{s3im_loss.1} parent=69 // pred_fallthru
          _
        %s214 = sand.u32 %s70, 1
        %s215 = sand.u32 %s70, 1
        %s216 = smul.addr %s215, 48
        %s217 = scalar_lea.vmem [#allocation3], %s216
        // Predicated region
        $region75: #{s3im_loss.1} parent=69 // pred_check
          %p218 = pneg %p83
        $region76: #{s3im_loss.1} parent=69 // pred_check_branch
          %220 = sbr.rel (%p218) target = $region78
        $region77: #{s3im_loss.1} parent=69 // pred_region
          _
        $region78: #{s3im_loss.1} parent=69 // pred_fallthru
          _
        %p221 = pneg %p31
        %p222 = pneg %p28
        %s223 = sand.u32 %s44, 1
        %s224 = sand.u32 %s44, 1
        %s225 = smul.addr %s224, 48
        %s226 = scalar_lea.vmem [#allocation2], %s225
        %p227 = pneg %p57
        %p228 = pneg %p54
        %s229 = sand.u32 %s70, 1
        %s230 = sand.u32 %s70, 1
        %s231 = smul.addr %s230, 48
        %s232 = scalar_lea.vmem [#allocation3], %s231
        %p233 = pneg %p83
        %p234 = pneg %p80
        %p235 = pneg %p104
        %p236 = pneg %p101
        %s237 = smul.u32 3, %s15
        %s238 = smul.u32 3, %s15
        %p239 = scmp.eq.s32.totalorder %s15, 0
        // Predicated region
        $region79: #{s3im_loss.1} parent=69 // pred_check
          %p240 = pneg %p239
        $region80: #{s3im_loss.1} parent=69 // pred_check_branch
          %242 = sbr.rel (%p240) target = $region82
        $region81: #{s3im_loss.1} parent=69 // pred_region
          %vm243 = vcmask 0
          %244 = vst.msk [vmem:[#allocation4] sm:$0x1] %vm243, 0.0
        $region82: #{s3im_loss.1} parent=69 // pred_fallthru
          _
        %v245 = vld [vmem:[%s210] sm:$0xff]
        %v246 = vld [vmem:[%s210 + $0x8] sm:$0xff]
        %v247 = vld [vmem:[%s210 + $0x10] sm:$0xff]
        %v248 = vld [vmem:[%s210 + $0x18] sm:$0xff]
        %v249 = vld [vmem:[%s210 + $0x20] sm:$0xff]
        %v250 = vld [vmem:[%s210 + $0x28] sm:$0xff]
        %v251 = vld [vmem:[%s217] sm:$0xff]
        %v252 = vld [vmem:[%s217 + $0x8] sm:$0xff]
        %v253 = vld [vmem:[%s217 + $0x10] sm:$0xff]
        %v254 = vld [vmem:[%s217 + $0x18] sm:$0xff]
        %v255 = vld [vmem:[%s217 + $0x20] sm:$0xff]
        %v256 = vld [vmem:[%s217 + $0x28] sm:$0xff]
        %v257 = vld [vmem:[%s0] sm:$0xff]
        %v258 = vld [vmem:[%s0 + $0x8] sm:$0xff]
        %260 = vset.pattern.permute.xlu0 0
        %261 = vperm.xlu0 %260, %v257
        %v262 = vpop.permute.xlu0 %261
        %265 = vset.pattern.permute.xlu0 0
        %266 = vperm.xlu0 %265, %v258
        %v267 = vpop.permute.xlu0 %266
        %v269 = vmul.f32 %v245, %v262
        %v270 = vmul.f32 %v246, %v262
        %v271 = vmul.f32 %v247, %v262
        %v272 = vmul.f32 %v248, %v267
        %v273 = vmul.f32 %v249, %v267
        %v274 = vmul.f32 %v250, %v267
        %v275 = vmul.f32 %v251, %v262
        %v276 = vmul.f32 %v252, %v262
        %v277 = vmul.f32 %v253, %v262
        %v278 = vmul.f32 %v254, %v267
        %v279 = vmul.f32 %v255, %v267
        %v280 = vmul.f32 %v256, %v267
        %v281 = vadd.f32 %v269, %v272
        %v282 = vrot.slane %v281, 4
        %v283 = vadd.f32 %v281, %v282
        %v284 = vrot.slane %v283, 2
        %v285 = vadd.f32 %v283, %v284
        %v286 = vrot.slane %v285, 1
        %v287 = vadd.f32 %v285, %v286
        %v288 = vadd.f32 %v270, %v273
        %v289 = vrot.slane %v288, 4
        %v290 = vadd.f32 %v288, %v289
        %v291 = vrot.slane %v290, 2
        %v292 = vadd.f32 %v290, %v291
        %v293 = vrot.slane %v292, 1
        %v294 = vadd.f32 %v292, %v293
        %v295 = vadd.f32 %v271, %v274
        %v296 = vrot.slane %v295, 4
        %v297 = vadd.f32 %v295, %v296
        %v298 = vrot.slane %v297, 2
        %v299 = vadd.f32 %v297, %v298
        %v300 = vrot.slane %v299, 1
        %v301 = vadd.f32 %v299, %v300
        %v302 = vadd.f32 %v275, %v278
        %v303 = vrot.slane %v302, 4
        %v304 = vadd.f32 %v302, %v303
        %v305 = vrot.slane %v304, 2
        %v306 = vadd.f32 %v304, %v305
        %v307 = vrot.slane %v306, 1
        %v308 = vadd.f32 %v306, %v307
        %v309 = vadd.f32 %v276, %v279
        %v310 = vrot.slane %v309, 4
        %v311 = vadd.f32 %v309, %v310
        %v312 = vrot.slane %v311, 2
        %v313 = vadd.f32 %v311, %v312
        %v314 = vrot.slane %v313, 1
        %v315 = vadd.f32 %v313, %v314
        %v316 = vadd.f32 %v277, %v280
        %v317 = vrot.slane %v316, 4
        %v318 = vadd.f32 %v316, %v317
        %v319 = vrot.slane %v318, 2
        %v320 = vadd.f32 %v318, %v319
        %v321 = vrot.slane %v320, 1
        %v322 = vadd.f32 %v320, %v321
        %v323 = vmul.f32 %v269, %v245
        %v324 = vmul.f32 %v270, %v246
        %v325 = vmul.f32 %v271, %v247
        %v326 = vmul.f32 %v272, %v248
        %v327 = vmul.f32 %v273, %v249
        %v328 = vmul.f32 %v274, %v250
        %v329 = vadd.f32 %v323, %v326
        %v330 = vrot.slane %v329, 4
        %v331 = vadd.f32 %v329, %v330
        %v332 = vrot.slane %v331, 2
        %v333 = vadd.f32 %v331, %v332
        %v334 = vrot.slane %v333, 1
        %v335 = vadd.f32 %v333, %v334
        %v336 = vadd.f32 %v324, %v327
        %v337 = vrot.slane %v336, 4
        %v338 = vadd.f32 %v336, %v337
        %v339 = vrot.slane %v338, 2
        %v340 = vadd.f32 %v338, %v339
        %v341 = vrot.slane %v340, 1
        %v342 = vadd.f32 %v340, %v341
        %v343 = vadd.f32 %v325, %v328
        %v344 = vrot.slane %v343, 4
        %v345 = vadd.f32 %v343, %v344
        %v346 = vrot.slane %v345, 2
        %v347 = vadd.f32 %v345, %v346
        %v348 = vrot.slane %v347, 1
        %v349 = vadd.f32 %v347, %v348
        %v350 = vmul.f32 %v275, %v251
        %v351 = vmul.f32 %v276, %v252
        %v352 = vmul.f32 %v277, %v253
        %v353 = vmul.f32 %v278, %v254
        %v354 = vmul.f32 %v279, %v255
        %v355 = vmul.f32 %v280, %v256
        %v356 = vadd.f32 %v350, %v353
        %v357 = vrot.slane %v356, 4
        %v358 = vadd.f32 %v356, %v357
        %v359 = vrot.slane %v358, 2
        %v360 = vadd.f32 %v358, %v359
        %v361 = vrot.slane %v360, 1
        %v362 = vadd.f32 %v360, %v361
        %v363 = vadd.f32 %v351, %v354
        %v364 = vrot.slane %v363, 4
        %v365 = vadd.f32 %v363, %v364
        %v366 = vrot.slane %v365, 2
        %v367 = vadd.f32 %v365, %v366
        %v368 = vrot.slane %v367, 1
        %v369 = vadd.f32 %v367, %v368
        %v370 = vadd.f32 %v352, %v355
        %v371 = vrot.slane %v370, 4
        %v372 = vadd.f32 %v370, %v371
        %v373 = vrot.slane %v372, 2
        %v374 = vadd.f32 %v372, %v373
        %v375 = vrot.slane %v374, 1
        %v376 = vadd.f32 %v374, %v375
        %v377 = vmul.f32 %v269, %v251
        %v378 = vmul.f32 %v270, %v252
        %v379 = vmul.f32 %v271, %v253
        %v380 = vmul.f32 %v272, %v254
        %v381 = vmul.f32 %v273, %v255
        %v382 = vmul.f32 %v274, %v256
        %v383 = vadd.f32 %v377, %v380
        %v384 = vrot.slane %v383, 4
        %v385 = vadd.f32 %v383, %v384
        %v386 = vrot.slane %v385, 2
        %v387 = vadd.f32 %v385, %v386
        %v388 = vrot.slane %v387, 1
        %v389 = vadd.f32 %v387, %v388
        %v390 = vadd.f32 %v378, %v381
        %v391 = vrot.slane %v390, 4
        %v392 = vadd.f32 %v390, %v391
        %v393 = vrot.slane %v392, 2
        %v394 = vadd.f32 %v392, %v393
        %v395 = vrot.slane %v394, 1
        %v396 = vadd.f32 %v394, %v395
        %v397 = vadd.f32 %v379, %v382
        %v398 = vrot.slane %v397, 4
        %v399 = vadd.f32 %v397, %v398
        %v400 = vrot.slane %v399, 2
        %v401 = vadd.f32 %v399, %v400
        %v402 = vrot.slane %v401, 1
        %v403 = vadd.f32 %v401, %v402
        %v404 = vmul.f32 %v287, %v287
        %v405 = vmul.f32 %v294, %v294
        %v406 = vmul.f32 %v301, %v301
        %v407 = vmul.f32 %v308, %v308
        %v408 = vmul.f32 %v315, %v315
        %v409 = vmul.f32 %v322, %v322
        %v410 = vmul.f32 %v287, %v308
        %v411 = vmul.f32 %v294, %v315
        %v412 = vmul.f32 %v301, %v322
        %v413 = vsub.f32 %v335, %v404
        %v414 = vsub.f32 %v342, %v405
        %v415 = vsub.f32 %v349, %v406
        %v416 = vsub.f32 %v362, %v407
        %v417 = vsub.f32 %v369, %v408
        %v418 = vsub.f32 %v376, %v409
        %v419 = vsub.f32 %v389, %v410
        %v420 = vsub.f32 %v396, %v411
        %v421 = vsub.f32 %v403, %v412
        %v422 = vmul.f32 %v410, 2.0
        %v423 = vmul.f32 %v411, 2.0
        %v424 = vmul.f32 %v412, 2.0
        %v425 = vadd.f32 %v422, 0.0001
        %v426 = vadd.f32 %v423, 0.0001
        %v427 = vadd.f32 %v424, 0.0001
        %v428 = vmul.f32 %v419, 2.0
        %v429 = vmul.f32 %v420, 2.0
        %v430 = vmul.f32 %v421, 2.0
        %v431 = vadd.f32 %v428, 0.0009
        %v432 = vadd.f32 %v429, 0.0009
        %v433 = vadd.f32 %v430, 0.0009
        %v434 = vmul.f32 %v425, %v431
        %v435 = vmul.f32 %v426, %v432
        %v436 = vmul.f32 %v427, %v433
        %v437 = vadd.f32 %v404, %v407
        %v438 = vadd.f32 %v405, %v408
        %v439 = vadd.f32 %v406, %v409
        %v440 = vadd.f32 %v437, 0.0001
        %v441 = vadd.f32 %v438, 0.0001
        %v442 = vadd.f32 %v439, 0.0001
        %v443 = vadd.f32 %v413, %v416
        %v444 = vadd.f32 %v414, %v417
        %v445 = vadd.f32 %v415, %v418
        %v446 = vadd.f32 %v443, 0.0009
        %v447 = vadd.f32 %v444, 0.0009
        %v448 = vadd.f32 %v445, 0.0009
        %v449 = vmul.f32 %v440, %v446
        %v450 = vmul.f32 %v441, %v447
        %v451 = vmul.f32 %v442, %v448
        %v452 = vrcp.pop %v449
        %v453 = vrcp.pop %v450
        %v454 = vrcp.pop %v451
        %v455 = vmul.f32 %v434, %v452
        %v456 = vmul.f32 %v435, %v453
        %v457 = vmul.f32 %v436, %v454
        %v458 = vld [vmem:[#allocation4] sm:$0x1]
        %v459 = vadd.f32 %v455, %v456
        %v460 = vadd.f32 %v459, %v457
        %461 = vadd.xlane.f32.xlu0 %v460
        %v462 = vpop.xlane.xlu0 %461
        %v463 = vadd.f32 %v458, %v462
        %vm464 = vcmask 0
        %465 = vst.msk [vmem:[#allocation4] sm:$0x1] %vm464, %v463
        %p466 = scmp.eq.s32.totalorder %s15, 4
        // Predicated region
        $region83: #{s3im_loss.1} parent=69 // pred_check
          %p467 = pneg %p466
        $region84: #{s3im_loss.1} parent=69 // pred_check_branch
          %469 = sbr.rel (%p467) target = $region86
        $region85: #{s3im_loss.1} parent=69 // pred_region
          %v470 = vld [vmem:[#allocation4] sm:$0x1]
          %v471 = vmul.f32 %v470, 0.00052083336
          %v472 = vsub.f32 1.0, %v471
          %473 = vst.msk [vmem:[#allocation4] sm:$0x1] %vm464, %v472
        $region86: #{s3im_loss.1} parent=69 // pred_fallthru
          _
        // Predicated region
        $region87: #{s3im_loss.1} parent=69 // pred_check
          %p474 = pneg %p101
        $region88: #{s3im_loss.1} parent=69 // pred_check_branch
          %476 = sbr.rel (%p474) target = $region90
        $region89: #{s3im_loss.1} parent=69 // pred_region
          %s478 = ssub.s32 16, 16
          %479 = vsyncadd [#allocation5], %s478
          %s481 = sshll.u32 [#allocation4], 4
          %s482 = int_to_ptr.vmem [resolvable:$true] %s481
          %484 = dma.vmem_to_hbm [thread:$0]  %s482, 16, %s3, [#allocation5]
        $region90: #{s3im_loss.1} parent=69 // pred_fallthru
          _
        // Predicated region
        $region91: #{s3im_loss.1} parent=69 // pred_check
          %p485 = pneg %p101
        $region92: #{s3im_loss.1} parent=69 // pred_check_branch
          %487 = sbr.rel (%p485) target = $region94
        $region93: #{s3im_loss.1} parent=69 // pred_region
          %488 = dma.done [#allocation5], 16
        $region94: #{s3im_loss.1} parent=69 // pred_fallthru
          _
      $region70: #{s3im_loss.1} parent=5 // pred_fallthru
        _
      %p489 = scmp.le.s32.totalorder 2, %s10
      // Predicated region
      $region95: #{s3im_loss.1} parent=5 // pred_check
        %p490 = pneg %p489
      $region96: #{s3im_loss.1} parent=5 // pred_check_branch
        %492 = sbr.rel (%p490) target = $region98
      $region97: #{s3im_loss.1} parent=5 // pred_region
        %s493 = ssub.s32 %s10, 2
      $region98: #{s3im_loss.1} parent=5 // pred_fallthru
        _
    $region6: #{s3im_loss.1} parent=1 // loop_footer
      %s14 = sadd.s32 1, %s10
    $region7: #{s3im_loss.1} parent=1 // loop_footer_branch
      %9 = sbr.rel target = $region3
    $region8: #{s3im_loss.1} parent=1 // loop_exit
      _
    %494 = vsyncpa [#allocation5], 1
    %s495 = scalar_lea.sflag [#allocation5], 1
    %496 = vsyncpa %s495, 1

</llo_original>
